<compile_context>
chip_gen: v5e
topology: v5e:2x2
jax: 0.10.0
libtpu: 0.0.40
codegen_flags: <defaults>
</compile_context>

<pallas_src>
import math

import jax
import jax.numpy as jnp
from jax.experimental import pallas as pl
from jax.experimental.pallas import tpu as pltpu

# ---- small synthetic BERT config (stands in for the 768-dim pretrained model) ----
VOCAB = 64
MAX_POS = 16
TYPE_VOCAB = 2
HIDDEN = 128          # lane-aligned hidden size (pretrained BERT would be 768)
NUM_HEADS = 4
HEAD_DIM = HIDDEN // NUM_HEADS
INTERMEDIATE = 256
NUM_LAYERS = 2
NUM_CLASSES = 2
CLS_PAD = 128         # lane-dense padded classifier width (real logits = first 2)
LN_EPS = 1e-12


def bert_relations_kernel(
    emb_ref, bias_ref, ln_e_g_ref, ln_e_b_ref,
    wqkv_ref, bqkv_ref, wo_ref, bo_ref,
    ln1_g_ref, ln1_b_ref,
    w1_ref, b1_ref, w2_ref, b2_ref,
    ln2_g_ref, ln2_b_ref,
    pool_w_ref, pool_b_ref, cls_w_ref, cls_b_ref,
    out_ref,
    x_scratch, ctx_scratch,
):
    layer = pl.program_id(0)
    B, S, H = x_scratch.shape

    def layer_norm(v, g, b):
        # single-pass E[x^2] - E[x]^2 form (one fewer lane reduction)
        mu = jnp.mean(v, axis=-1, keepdims=True)
        var = jnp.mean(v * v, axis=-1, keepdims=True) - mu * mu
        return (v - mu) * jax.lax.rsqrt(var + LN_EPS) * g + b

    # embedding LayerNorm only on the first grid step
    @pl.when(layer == 0)
    def _():
        x_scratch[...] = layer_norm(emb_ref[...], ln_e_g_ref[...], ln_e_b_ref[...])

    x = x_scratch[...]            # (B, S, H) f32, carried across layers
    bias = bias_ref[...]          # (B, 1, S) additive attention-mask bias

    # ---- fused QKV projection: one (B*S, H) x (H, 3H) bf16 MXU matmul ----
    # (1/sqrt(head_dim) is already folded into the Q columns of wqkv/bqkv.)
    x2 = x.reshape(B * S, H)
    qkv = (jnp.dot(x2.astype(jnp.bfloat16), wqkv_ref[...],
                   preferred_element_type=jnp.float32)
           + bqkv_ref[...])       # (B*S, 3H) f32

    q = qkv[:, 0 * H:1 * H].reshape(B, S, H)
    k = qkv[:, 1 * H:2 * H].reshape(B, S, H)
    v = qkv[:, 2 * H:3 * H].reshape(B, S, H)

    # ---- multi-head attention ----
    # Heads stay a small unrolled loop (single-batch-dim einsums are the safe
    # Mosaic pattern); contexts are written into a contiguous bf16 scratch so
    # the output projection is ONE K=H matmul.
    for h in range(NUM_HEADS):
        sl = slice(h * HEAD_DIM, (h + 1) * HEAD_DIM)
        qh = q[..., sl].astype(jnp.bfloat16)
        kh = k[..., sl].astype(jnp.bfloat16)
        vh = v[..., sl].astype(jnp.bfloat16)
        s = jnp.einsum('bqd,bkd->bqk', qh, kh,
                       preferred_element_type=jnp.float32) + bias
        s = s - jnp.max(s, axis=-1, keepdims=True)
        p = jnp.exp(s)
        inv_l = pl.reciprocal(jnp.sum(p, axis=-1, keepdims=True), approx=True)
        ctx = jnp.einsum('bqk,bkd->bqd', p.astype(jnp.bfloat16), vh,
                         preferred_element_type=jnp.float32) * inv_l
        ctx_scratch[:, sl] = ctx.reshape(B * S, HEAD_DIM).astype(jnp.bfloat16)

    attn = (jnp.dot(ctx_scratch[...], wo_ref[...],
                    preferred_element_type=jnp.float32)
            + bo_ref[...]).reshape(B, S, H)
    x = layer_norm(x + attn, ln1_g_ref[...], ln1_b_ref[...])

    # ---- feed-forward ----
    x2 = x.reshape(B * S, H)
    hmid = (jnp.dot(x2.astype(jnp.bfloat16), w1_ref[...],
                    preferred_element_type=jnp.float32) + b1_ref[...])
    # TODO(synk): HF BERT default is exact erf GELU; tanh approximation used (EUP-friendly).
    hmid = jax.nn.gelu(hmid, approximate=True)
    ffn = (jnp.dot(hmid.astype(jnp.bfloat16), w2_ref[...],
                   preferred_element_type=jnp.float32)
           + b2_ref[...]).reshape(B, S, H)
    x = layer_norm(x + ffn, ln2_g_ref[...], ln2_b_ref[...])
    x_scratch[...] = x

    # ---- pooler + classifier on the final layer only ----
    @pl.when(layer == pl.num_programs(0) - 1)
    def _():
        cls_tok = x[:, 0, :]                                        # (B, H)
        pooled = jnp.tanh(
            jnp.dot(cls_tok.astype(jnp.bfloat16), pool_w_ref[...],
                    preferred_element_type=jnp.float32) + pool_b_ref[...])
        # dropout(p=0.5) is identity in eval mode
        out_ref[...] = (jnp.dot(pooled.astype(jnp.bfloat16), cls_w_ref[...],
                                preferred_element_type=jnp.float32)
                        + cls_b_ref[...])                           # (B, 128) lane-dense


def init_params(key):
    keys = iter(jax.random.split(key, 16))

    def nrm(shape):
        return (0.02 * jax.random.normal(next(keys), shape)).astype(jnp.float32)

    L, H, I = NUM_LAYERS, HIDDEN, INTERMEDIATE
    p = {
        'word_emb': nrm((VOCAB, H)),
        'pos_emb': nrm((MAX_POS, H)),
        'type_emb': nrm((TYPE_VOCAB, H)),
        'ln_e_g': jnp.ones((1, H), jnp.float32),
        'ln_e_b': jnp.zeros((1, H), jnp.float32),
        'wq': nrm((L, H, H)), 'bq': jnp.zeros((L, 1, H), jnp.float32),
        'wk': nrm((L, H, H)), 'bk': jnp.zeros((L, 1, H), jnp.float32),
        'wv': nrm((L, H, H)), 'bv': jnp.zeros((L, 1, H), jnp.float32),
        'wo': nrm((L, H, H)), 'bo': jnp.zeros((L, 1, H), jnp.float32),
        'ln1_g': jnp.ones((L, 1, H), jnp.float32),
        'ln1_b': jnp.zeros((L, 1, H), jnp.float32),
        'w1': nrm((L, H, I)), 'b1': jnp.zeros((L, 1, I), jnp.float32),
        'w2': nrm((L, I, H)), 'b2': jnp.zeros((L, 1, H), jnp.float32),
        'ln2_g': jnp.ones((L, 1, H), jnp.float32),
        'ln2_b': jnp.zeros((L, 1, H), jnp.float32),
        'pool_w': nrm((H, H)), 'pool_b': jnp.zeros((1, H), jnp.float32),
        'cls_w': nrm((H, NUM_CLASSES)),
        'cls_b': jnp.zeros((1, NUM_CLASSES), jnp.float32),
    }
    return p


def bert_for_relations_forward(params, input_ids, attention_mask, tags):
    # use_cls_embedding=True (module default): tags are unused in forward.
    del tags
    B, S = input_ids.shape
    H, I, L = HIDDEN, INTERMEDIATE, NUM_LAYERS

    # embedding gather + sum (glue, stays in plain JAX)
    emb = (params['word_emb'][input_ids]
           + params['pos_emb'][jnp.arange(S)][None, :, :]
           + params['type_emb'][0][None, None, :]).astype(jnp.float32)

    # extended attention mask -> additive bias, shape (B, 1, S)
    mask_bias = ((1.0 - attention_mask.astype(jnp.float32)) * -10000.0)[:, None, :]

    # fused QKV weights/biases with 1/sqrt(head_dim) folded into the Q columns
    # (one-time weight-side fold; matmul weights in bf16, f32 accum in-kernel)
    scale = 1.0 / math.sqrt(HEAD_DIM)
    wqkv = jnp.concatenate(
        [params['wq'] * scale, params['wk'], params['wv']],
        axis=-1).astype(jnp.bfloat16)
    bqkv = jnp.concatenate(
        [params['bq'] * scale, params['bk'], params['bv']], axis=-1)
    wo = params['wo'].astype(jnp.bfloat16)
    w1 = params['w1'].astype(jnp.bfloat16)
    w2 = params['w2'].astype(jnp.bfloat16)
    pool_w = params['pool_w'].astype(jnp.bfloat16)
    cls_w = jnp.zeros((H, CLS_PAD), jnp.float32
                      ).at[:, :NUM_CLASSES].set(params['cls_w']).astype(jnp.bfloat16)
    cls_b = jnp.zeros((1, CLS_PAD), jnp.float32).at[:, :NUM_CLASSES].set(params['cls_b'])

    inputs = [
        emb, mask_bias, params['ln_e_g'], params['ln_e_b'],
        wqkv, bqkv, wo, params['bo'],
        params['ln1_g'], params['ln1_b'],
        w1, params['b1'], w2, params['b2'],
        params['ln2_g'], params['ln2_b'],
        pool_w, params['pool_b'], cls_w, cls_b,
    ]

    # constant-index (resident broadcast) specs vs. per-layer streamed specs
    full = lambda shape: pl.BlockSpec(shape, lambda l: (0,) * len(shape))
    per_layer = lambda shape: pl.BlockSpec((None,) + shape, lambda l: (l, 0, 0))

    in_specs = [
        full((B, S, H)),            # emb
        full((B, 1, S)),            # mask bias
        full((1, H)),               # ln_e_g
        full((1, H)),               # ln_e_b
        per_layer((H, 3 * H)),      # wqkv
        per_layer((1, 3 * H)),      # bqkv
        per_layer((H, H)),          # wo
        per_layer((1, H)),          # bo
        per_layer((1, H)),          # ln1_g
        per_layer((1, H)),          # ln1_b
        per_layer((H, I)),          # w1
        per_layer((1, I)),          # b1
        per_layer((I, H)),          # w2
        per_layer((1, H)),          # b2
        per_layer((1, H)),          # ln2_g
        per_layer((1, H)),          # ln2_b
        full((H, H)),               # pool_w
        full((1, H)),               # pool_b
        full((H, CLS_PAD)),         # cls_w (padded, lane-dense)
        full((1, CLS_PAD)),         # cls_b (padded)
    ]

    flops = L * (2 * B * S * H * 3 * H       # QKV
                 + 4 * B * S * S * H         # scores + ctx (all heads)
                 + 2 * B * S * H * H         # output proj
                 + 4 * B * S * H * I         # FFN
                 ) + 2 * B * H * H + 2 * B * H * CLS_PAD
    transcendentals = L * (B * NUM_HEADS * S * S + B * S * I) + B * H
    bytes_accessed = int(sum(a.size * a.dtype.itemsize for a in inputs)
                         + B * CLS_PAD * 4)

    padded = pl.pallas_call(
        bert_relations_kernel,
        out_shape=jax.ShapeDtypeStruct((B, CLS_PAD), jnp.float32),
        grid_spec=pltpu.PrefetchScalarGridSpec(
            num_scalar_prefetch=0,
            grid=(L,),
            in_specs=in_specs,
            out_specs=pl.BlockSpec((B, CLS_PAD), lambda l: (0, 0)),
            scratch_shapes=[
                pltpu.VMEM((B, S, H), jnp.float32),       # activation carry
                pltpu.VMEM((B * S, H), jnp.bfloat16),     # assembled attention ctx
            ],
        ),
        compiler_params=pltpu.CompilerParams(
            dimension_semantics=("arbitrary",),
            vmem_limit_bytes=32 * 1024 * 1024,
        ),
        cost_estimate=pl.CostEstimate(flops=int(flops),
                                      transcendentals=int(transcendentals),
                                      bytes_accessed=bytes_accessed),
    )(*inputs)

    return padded[:, :NUM_CLASSES]


if __name__ == "__main__":
    key = jax.random.PRNGKey(0)
    pkey, ikey = jax.random.split(key)
    params = init_params(pkey)

    B, S = 2, 8
    input_ids = jax.random.randint(ikey, (B, S), 0, VOCAB, dtype=jnp.int32)
    attention_mask = jnp.array([[1] * S, [1] * (S - 2) + [0, 0]], dtype=jnp.int32)
    tags = jnp.array([[1, 3], [2, 5]], dtype=jnp.int32)   # unused (use_cls_embedding=True)

    logits = jax.jit(bert_for_relations_forward)(params, input_ids, attention_mask, tags)
    jax.block_until_ready(logits)
    assert logits.shape == (B, NUM_CLASSES) and logits.dtype == jnp.float32
    print("KERNEL_OK")
</pallas_src>

<mosaic_0001>
module attributes {stable_mosaic.version = 11 : i64} {
  func.func @bert_relations_kernel(%arg0: i32, %arg1: memref<2x8x128xf32, #tpu.memory_space<vmem>>, %arg2: memref<2x1x8xf32, #tpu.memory_space<vmem>>, %arg3: memref<1x128xf32, #tpu.memory_space<vmem>>, %arg4: memref<1x128xf32, #tpu.memory_space<vmem>>, %arg5: memref<1x128x384xbf16, #tpu.memory_space<vmem>>, %arg6: memref<1x1x384xf32, #tpu.memory_space<vmem>>, %arg7: memref<1x128x128xbf16, #tpu.memory_space<vmem>>, %arg8: memref<1x1x128xf32, #tpu.memory_space<vmem>>, %arg9: memref<1x1x128xf32, #tpu.memory_space<vmem>>, %arg10: memref<1x1x128xf32, #tpu.memory_space<vmem>>, %arg11: memref<1x128x256xbf16, #tpu.memory_space<vmem>>, %arg12: memref<1x1x256xf32, #tpu.memory_space<vmem>>, %arg13: memref<1x256x128xbf16, #tpu.memory_space<vmem>>, %arg14: memref<1x1x128xf32, #tpu.memory_space<vmem>>, %arg15: memref<1x1x128xf32, #tpu.memory_space<vmem>>, %arg16: memref<1x1x128xf32, #tpu.memory_space<vmem>>, %arg17: memref<128x128xbf16, #tpu.memory_space<vmem>>, %arg18: memref<1x128xf32, #tpu.memory_space<vmem>>, %arg19: memref<128x128xbf16, #tpu.memory_space<vmem>>, %arg20: memref<1x128xf32, #tpu.memory_space<vmem>>, %arg21: memref<2x128xf32, #tpu.memory_space<vmem>>, %arg22: memref<2x8x128xf32, #tpu.memory_space<vmem>>, %arg23: memref<16x128xbf16, #tpu.memory_space<vmem>>) attributes {dimension_semantics = [#tpu.dimension_semantics<arbitrary>], iteration_bounds = array<i64: 2>, scalar_prefetch = 0 : i64, scratch_operands = 2 : i64, tpu.core_type = #tpu.core_type<tc>, window_params = [{pipeline_mode = #tpu.pipeline_mode<synchronous>, transform_indices = @transform_0, window_bounds = array<i64: 2, 8, 128>}, {pipeline_mode = #tpu.pipeline_mode<synchronous>, transform_indices = @transform_1, window_bounds = array<i64: 2, 1, 8>}, {pipeline_mode = #tpu.pipeline_mode<synchronous>, transform_indices = @transform_2, window_bounds = array<i64: 1, 128>}, {pipeline_mode = #tpu.pipeline_mode<synchronous>, transform_indices = @transform_3, window_bounds = array<i64: 1, 128>}, {transform_indices = @transform_4, window_bounds = array<i64: 1, 128, 384>}, {transform_indices = @transform_5, window_bounds = array<i64: 1, 1, 384>}, {transform_indices = @transform_6, window_bounds = array<i64: 1, 128, 128>}, {transform_indices = @transform_7, window_bounds = array<i64: 1, 1, 128>}, {transform_indices = @transform_8, window_bounds = array<i64: 1, 1, 128>}, {transform_indices = @transform_9, window_bounds = array<i64: 1, 1, 128>}, {transform_indices = @transform_10, window_bounds = array<i64: 1, 128, 256>}, {transform_indices = @transform_11, window_bounds = array<i64: 1, 1, 256>}, {transform_indices = @transform_12, window_bounds = array<i64: 1, 256, 128>}, {transform_indices = @transform_13, window_bounds = array<i64: 1, 1, 128>}, {transform_indices = @transform_14, window_bounds = array<i64: 1, 1, 128>}, {transform_indices = @transform_15, window_bounds = array<i64: 1, 1, 128>}, {pipeline_mode = #tpu.pipeline_mode<synchronous>, transform_indices = @transform_16, window_bounds = array<i64: 128, 128>}, {pipeline_mode = #tpu.pipeline_mode<synchronous>, transform_indices = @transform_17, window_bounds = array<i64: 1, 128>}, {pipeline_mode = #tpu.pipeline_mode<synchronous>, transform_indices = @transform_18, window_bounds = array<i64: 128, 128>}, {pipeline_mode = #tpu.pipeline_mode<synchronous>, transform_indices = @transform_19, window_bounds = array<i64: 1, 128>}, {pipeline_mode = #tpu.pipeline_mode<synchronous>, transform_indices = @transform_20, window_bounds = array<i64: 2, 128>}]} {
    %c0_i32 = arith.constant 0 : i32
    %0 = arith.cmpi eq, %arg0, %c0_i32 : i32
    %1 = arith.extui %0 : i1 to i32
    %c0_i32_0 = arith.constant 0 : i32
    %2 = arith.cmpi ne, %1, %c0_i32_0 : i32
    scf.if %2 {
      %c0_86 = arith.constant 0 : index
      %c0_87 = arith.constant 0 : index
      %c0_88 = arith.constant 0 : index
      %218 = vector.load %arg1[%c0_86, %c0_87, %c0_88] : memref<2x8x128xf32, #tpu.memory_space<vmem>>, vector<2x8x128xf32>
      %c0_89 = arith.constant 0 : index
      %c0_90 = arith.constant 0 : index
      %219 = vector.load %arg3[%c0_89, %c0_90] : memref<1x128xf32, #tpu.memory_space<vmem>>, vector<1x128xf32>
      %c0_91 = arith.constant 0 : index
      %c0_92 = arith.constant 0 : index
      %220 = vector.load %arg4[%c0_91, %c0_92] : memref<1x128xf32, #tpu.memory_space<vmem>>, vector<1x128xf32>
      %cst_93 = arith.constant dense<0.000000e+00> : vector<2x8xf32>
      %221 = vector.multi_reduction <add>, %218, %cst_93 [2] : vector<2x8x128xf32> to vector<2x8xf32>
      %222 = vector.shape_cast %221 : vector<2x8xf32> to vector<2x8x1xf32>
      %cst_94 = arith.constant 1.280000e+02 : f32
      %223 = vector.broadcast %cst_94 : f32 to vector<2x8x1xf32>
      %224 = arith.divf %222, %223 : vector<2x8x1xf32>
      %225 = arith.mulf %218, %218 : vector<2x8x128xf32>
      %cst_95 = arith.constant dense<0.000000e+00> : vector<2x8xf32>
      %226 = vector.multi_reduction <add>, %225, %cst_95 [2] : vector<2x8x128xf32> to vector<2x8xf32>
      %227 = vector.shape_cast %226 : vector<2x8xf32> to vector<2x8x1xf32>
      %cst_96 = arith.constant 1.280000e+02 : f32
      %228 = vector.broadcast %cst_96 : f32 to vector<2x8x1xf32>
      %229 = arith.divf %227, %228 : vector<2x8x1xf32>
      %230 = arith.mulf %224, %224 : vector<2x8x1xf32>
      %231 = arith.subf %229, %230 : vector<2x8x1xf32>
      %232 = vector.broadcast %224 : vector<2x8x1xf32> to vector<2x8x128xf32>
      %233 = arith.subf %218, %232 : vector<2x8x128xf32>
      %cst_97 = arith.constant 9.99999996E-13 : f32
      %234 = vector.broadcast %cst_97 : f32 to vector<2x8x1xf32>
      %235 = arith.addf %231, %234 : vector<2x8x1xf32>
      %236 = math.rsqrt %235 : vector<2x8x1xf32>
      %237 = vector.broadcast %236 : vector<2x8x1xf32> to vector<2x8x128xf32>
      %238 = arith.mulf %233, %237 : vector<2x8x128xf32>
      %239 = vector.shape_cast %219 : vector<1x128xf32> to vector<1x1x128xf32>
      %240 = vector.broadcast %239 : vector<1x1x128xf32> to vector<2x8x128xf32>
      %241 = arith.mulf %238, %240 : vector<2x8x128xf32>
      %242 = vector.shape_cast %220 : vector<1x128xf32> to vector<1x1x128xf32>
      %243 = vector.broadcast %242 : vector<1x1x128xf32> to vector<2x8x128xf32>
      %244 = arith.addf %241, %243 : vector<2x8x128xf32>
      %c0_98 = arith.constant 0 : index
      %c0_99 = arith.constant 0 : index
      %c0_100 = arith.constant 0 : index
      %245 = vector.load %arg22[%c0_98, %c0_99, %c0_100] : memref<2x8x128xf32, #tpu.memory_space<vmem>>, vector<2x8x128xf32>
      tpu.vector_store %arg22[%c0_98, %c0_99, %c0_100], %244 {strides = array<i32>} : memref<2x8x128xf32, #tpu.memory_space<vmem>>, vector<2x8x128xf32>,
    } else {
    }
    %c0 = arith.constant 0 : index
    %c0_1 = arith.constant 0 : index
    %c0_2 = arith.constant 0 : index
    %3 = vector.load %arg22[%c0, %c0_1, %c0_2] : memref<2x8x128xf32, #tpu.memory_space<vmem>>, vector<2x8x128xf32>
    %c0_3 = arith.constant 0 : index
    %c0_4 = arith.constant 0 : index
    %c0_5 = arith.constant 0 : index
    %4 = vector.load %arg2[%c0_3, %c0_4, %c0_5] : memref<2x1x8xf32, #tpu.memory_space<vmem>>, vector<2x1x8xf32>
    %5 = vector.shape_cast %3 : vector<2x8x128xf32> to vector<16x128xf32>
    %6 = arith.truncf %5 : vector<16x128xf32> to vector<16x128xbf16>
    %c0_6 = arith.constant 0 : index
    %c0_7 = arith.constant 0 : index
    %c0_8 = arith.constant 0 : index
    %7 = vector.load %arg5[%c0_6, %c0_7, %c0_8] : memref<1x128x384xbf16, #tpu.memory_space<vmem>>, vector<1x128x384xbf16>
    %8 = vector.shape_cast %7 : vector<1x128x384xbf16> to vector<128x384xbf16>
    %cst = arith.constant dense<0.000000e+00> : vector<16x384xf32>
    %9 = tpu.matmul %6, %8, %cst {dimension_numbers = #tpu.dot_dimension_numbers<[1], [0], [0], [1], [0, 0, 1, 1], [], []>} : vector<16x128xbf16>, vector<128x384xbf16>, vector<16x384xf32> -> vector<16x384xf32>
    %c0_9 = arith.constant 0 : index
    %c0_10 = arith.constant 0 : index
    %c0_11 = arith.constant 0 : index
    %10 = vector.load %arg6[%c0_9, %c0_10, %c0_11] : memref<1x1x384xf32, #tpu.memory_space<vmem>>, vector<1x1x384xf32>
    %11 = vector.shape_cast %10 : vector<1x1x384xf32> to vector<1x384xf32>
    %12 = vector.broadcast %11 : vector<1x384xf32> to vector<16x384xf32>
    %13 = arith.addf %9, %12 : vector<16x384xf32>
    %14 = vector.extract_strided_slice %13 {offsets = [0, 0], sizes = [16, 128], strides = [1, 1]} : vector<16x384xf32> to vector<16x128xf32>
    %15 = vector.shape_cast %14 : vector<16x128xf32> to vector<2x8x128xf32>
    %16 = vector.extract_strided_slice %13 {offsets = [0, 128], sizes = [16, 128], strides = [1, 1]} : vector<16x384xf32> to vector<16x128xf32>
    %17 = vector.shape_cast %16 : vector<16x128xf32> to vector<2x8x128xf32>
    %18 = vector.extract_strided_slice %13 {offsets = [0, 256], sizes = [16, 128], strides = [1, 1]} : vector<16x384xf32> to vector<16x128xf32>
    %19 = vector.shape_cast %18 : vector<16x128xf32> to vector<2x8x128xf32>
    %20 = vector.extract_strided_slice %15 {offsets = [0, 0, 0], sizes = [2, 8, 32], strides = [1, 1, 1]} : vector<2x8x128xf32> to vector<2x8x32xf32>
    %21 = arith.truncf %20 : vector<2x8x32xf32> to vector<2x8x32xbf16>
    %22 = vector.extract_strided_slice %17 {offsets = [0, 0, 0], sizes = [2, 8, 32], strides = [1, 1, 1]} : vector<2x8x128xf32> to vector<2x8x32xf32>
    %23 = arith.truncf %22 : vector<2x8x32xf32> to vector<2x8x32xbf16>
    %24 = vector.extract_strided_slice %19 {offsets = [0, 0, 0], sizes = [2, 8, 32], strides = [1, 1, 1]} : vector<2x8x128xf32> to vector<2x8x32xf32>
    %25 = arith.truncf %24 : vector<2x8x32xf32> to vector<2x8x32xbf16>
    "tpu.trace_start"() <{level = 10 : i32, message = "bqd,bkd->bqk"}> : () -> ()
    %cst_12 = arith.constant dense<0.000000e+00> : vector<2x8x8xf32>
    %26 = tpu.matmul %21, %23, %cst_12 {dimension_numbers = #tpu.dot_dimension_numbers<[2], [2], [1], [1], [0, 0, 0, 1, 1, 1], [0], [0]>} : vector<2x8x32xbf16>, vector<2x8x32xbf16>, vector<2x8x8xf32> -> vector<2x8x8xf32>
    "tpu.trace_stop"() : () -> ()
    %27 = vector.broadcast %4 : vector<2x1x8xf32> to vector<2x8x8xf32>
    %28 = arith.addf %26, %27 : vector<2x8x8xf32>
    %cst_13 = arith.constant dense<0xFF800000> : vector<2x8xf32>
    %29 = vector.multi_reduction <maximumf>, %28, %cst_13 [2] : vector<2x8x8xf32> to vector<2x8xf32>
    %30 = vector.shape_cast %29 : vector<2x8xf32> to vector<2x8x1xf32>
    %31 = vector.broadcast %30 : vector<2x8x1xf32> to vector<2x8x8xf32>
    %32 = arith.subf %28, %31 : vector<2x8x8xf32>
    %33 = math.exp %32 : vector<2x8x8xf32>
    %cst_14 = arith.constant dense<0.000000e+00> : vector<2x8xf32>
    %34 = vector.multi_reduction <add>, %33, %cst_14 [2] : vector<2x8x8xf32> to vector<2x8xf32>
    %35 = vector.shape_cast %34 : vector<2x8xf32> to vector<2x8x1xf32>
    %36 = tpu.reciprocal %35 {approx = true} : vector<2x8x1xf32> -> vector<2x8x1xf32>
    %37 = arith.truncf %33 : vector<2x8x8xf32> to vector<2x8x8xbf16>
    "tpu.trace_start"() <{level = 10 : i32, message = "bqk,bkd->bqd"}> : () -> ()
    %cst_15 = arith.constant dense<0.000000e+00> : vector<2x8x32xf32>
    %38 = tpu.matmul %37, %25, %cst_15 {dimension_numbers = #tpu.dot_dimension_numbers<[2], [1], [1], [2], [0, 0, 0, 1, 1, 2], [0], [0]>} : vector<2x8x8xbf16>, vector<2x8x32xbf16>, vector<2x8x32xf32> -> vector<2x8x32xf32>
    "tpu.trace_stop"() : () -> ()
    %39 = vector.broadcast %36 : vector<2x8x1xf32> to vector<2x8x32xf32>
    %40 = arith.mulf %38, %39 : vector<2x8x32xf32>
    %41 = vector.shape_cast %40 : vector<2x8x32xf32> to vector<16x32xf32>
    %42 = arith.truncf %41 : vector<16x32xf32> to vector<16x32xbf16>
    %c0_16 = arith.constant 0 : index
    %c0_17 = arith.constant 0 : index
    %43 = vector.load %arg23[%c0_16, %c0_17] : memref<16x128xbf16, #tpu.memory_space<vmem>>, vector<16x32xbf16>
    tpu.vector_store %arg23[%c0_16, %c0_17], %42 {strides = array<i32>} : memref<16x128xbf16, #tpu.memory_space<vmem>>, vector<16x32xbf16>,
    %44 = vector.extract_strided_slice %15 {offsets = [0, 0, 32], sizes = [2, 8, 32], strides = [1, 1, 1]} : vector<2x8x128xf32> to vector<2x8x32xf32>
    %45 = arith.truncf %44 : vector<2x8x32xf32> to vector<2x8x32xbf16>
    %46 = vector.extract_strided_slice %17 {offsets = [0, 0, 32], sizes = [2, 8, 32], strides = [1, 1, 1]} : vector<2x8x128xf32> to vector<2x8x32xf32>
    %47 = arith.truncf %46 : vector<2x8x32xf32> to vector<2x8x32xbf16>
    %48 = vector.extract_strided_slice %19 {offsets = [0, 0, 32], sizes = [2, 8, 32], strides = [1, 1, 1]} : vector<2x8x128xf32> to vector<2x8x32xf32>
    %49 = arith.truncf %48 : vector<2x8x32xf32> to vector<2x8x32xbf16>
    "tpu.trace_start"() <{level = 10 : i32, message = "bqd,bkd->bqk"}> : () -> ()
    %cst_18 = arith.constant dense<0.000000e+00> : vector<2x8x8xf32>
    %50 = tpu.matmul %45, %47, %cst_18 {dimension_numbers = #tpu.dot_dimension_numbers<[2], [2], [1], [1], [0, 0, 0, 1, 1, 1], [0], [0]>} : vector<2x8x32xbf16>, vector<2x8x32xbf16>, vector<2x8x8xf32> -> vector<2x8x8xf32>
    "tpu.trace_stop"() : () -> ()
    %51 = vector.broadcast %4 : vector<2x1x8xf32> to vector<2x8x8xf32>
    %52 = arith.addf %50, %51 : vector<2x8x8xf32>
    %cst_19 = arith.constant dense<0xFF800000> : vector<2x8xf32>
    %53 = vector.multi_reduction <maximumf>, %52, %cst_19 [2] : vector<2x8x8xf32> to vector<2x8xf32>
    %54 = vector.shape_cast %53 : vector<2x8xf32> to vector<2x8x1xf32>
    %55 = vector.broadcast %54 : vector<2x8x1xf32> to vector<2x8x8xf32>
    %56 = arith.subf %52, %55 : vector<2x8x8xf32>
    %57 = math.exp %56 : vector<2x8x8xf32>
    %cst_20 = arith.constant dense<0.000000e+00> : vector<2x8xf32>
    %58 = vector.multi_reduction <add>, %57, %cst_20 [2] : vector<2x8x8xf32> to vector<2x8xf32>
    %59 = vector.shape_cast %58 : vector<2x8xf32> to vector<2x8x1xf32>
    %60 = tpu.reciprocal %59 {approx = true} : vector<2x8x1xf32> -> vector<2x8x1xf32>
    %61 = arith.truncf %57 : vector<2x8x8xf32> to vector<2x8x8xbf16>
    "tpu.trace_start"() <{level = 10 : i32, message = "bqk,bkd->bqd"}> : () -> ()
    %cst_21 = arith.constant dense<0.000000e+00> : vector<2x8x32xf32>
    %62 = tpu.matmul %61, %49, %cst_21 {dimension_numbers = #tpu.dot_dimension_numbers<[2], [1], [1], [2], [0, 0, 0, 1, 1, 2], [0], [0]>} : vector<2x8x8xbf16>, vector<2x8x32xbf16>, vector<2x8x32xf32> -> vector<2x8x32xf32>
    "tpu.trace_stop"() : () -> ()
    %63 = vector.broadcast %60 : vector<2x8x1xf32> to vector<2x8x32xf32>
    %64 = arith.mulf %62, %63 : vector<2x8x32xf32>
    %65 = vector.shape_cast %64 : vector<2x8x32xf32> to vector<16x32xf32>
    %66 = arith.truncf %65 : vector<16x32xf32> to vector<16x32xbf16>
    %c0_22 = arith.constant 0 : index
    %c32 = arith.constant 32 : index
    %67 = vector.load %arg23[%c0_22, %c32] : memref<16x128xbf16, #tpu.memory_space<vmem>>, vector<16x32xbf16>
    tpu.vector_store %arg23[%c0_22, %c32], %66 {strides = array<i32>} : memref<16x128xbf16, #tpu.memory_space<vmem>>, vector<16x32xbf16>,
    %68 = vector.extract_strided_slice %15 {offsets = [0, 0, 64], sizes = [2, 8, 32], strides = [1, 1, 1]} : vector<2x8x128xf32> to vector<2x8x32xf32>
    %69 = arith.truncf %68 : vector<2x8x32xf32> to vector<2x8x32xbf16>
    %70 = vector.extract_strided_slice %17 {offsets = [0, 0, 64], sizes = [2, 8, 32], strides = [1, 1, 1]} : vector<2x8x128xf32> to vector<2x8x32xf32>
    %71 = arith.truncf %70 : vector<2x8x32xf32> to vector<2x8x32xbf16>
    %72 = vector.extract_strided_slice %19 {offsets = [0, 0, 64], sizes = [2, 8, 32], strides = [1, 1, 1]} : vector<2x8x128xf32> to vector<2x8x32xf32>
    %73 = arith.truncf %72 : vector<2x8x32xf32> to vector<2x8x32xbf16>
    "tpu.trace_start"() <{level = 10 : i32, message = "bqd,bkd->bqk"}> : () -> ()
    %cst_23 = arith.constant dense<0.000000e+00> : vector<2x8x8xf32>
    %74 = tpu.matmul %69, %71, %cst_23 {dimension_numbers = #tpu.dot_dimension_numbers<[2], [2], [1], [1], [0, 0, 0, 1, 1, 1], [0], [0]>} : vector<2x8x32xbf16>, vector<2x8x32xbf16>, vector<2x8x8xf32> -> vector<2x8x8xf32>
    "tpu.trace_stop"() : () -> ()
    %75 = vector.broadcast %4 : vector<2x1x8xf32> to vector<2x8x8xf32>
    %76 = arith.addf %74, %75 : vector<2x8x8xf32>
    %cst_24 = arith.constant dense<0xFF800000> : vector<2x8xf32>
    %77 = vector.multi_reduction <maximumf>, %76, %cst_24 [2] : vector<2x8x8xf32> to vector<2x8xf32>
    %78 = vector.shape_cast %77 : vector<2x8xf32> to vector<2x8x1xf32>
    %79 = vector.broadcast %78 : vector<2x8x1xf32> to vector<2x8x8xf32>
    %80 = arith.subf %76, %79 : vector<2x8x8xf32>
    %81 = math.exp %80 : vector<2x8x8xf32>
    %cst_25 = arith.constant dense<0.000000e+00> : vector<2x8xf32>
    %82 = vector.multi_reduction <add>, %81, %cst_25 [2] : vector<2x8x8xf32> to vector<2x8xf32>
    %83 = vector.shape_cast %82 : vector<2x8xf32> to vector<2x8x1xf32>
    %84 = tpu.reciprocal %83 {approx = true} : vector<2x8x1xf32> -> vector<2x8x1xf32>
    %85 = arith.truncf %81 : vector<2x8x8xf32> to vector<2x8x8xbf16>
    "tpu.trace_start"() <{level = 10 : i32, message = "bqk,bkd->bqd"}> : () -> ()
    %cst_26 = arith.constant dense<0.000000e+00> : vector<2x8x32xf32>
    %86 = tpu.matmul %85, %73, %cst_26 {dimension_numbers = #tpu.dot_dimension_numbers<[2], [1], [1], [2], [0, 0, 0, 1, 1, 2], [0], [0]>} : vector<2x8x8xbf16>, vector<2x8x32xbf16>, vector<2x8x32xf32> -> vector<2x8x32xf32>
    "tpu.trace_stop"() : () -> ()
    %87 = vector.broadcast %84 : vector<2x8x1xf32> to vector<2x8x32xf32>
    %88 = arith.mulf %86, %87 : vector<2x8x32xf32>
    %89 = vector.shape_cast %88 : vector<2x8x32xf32> to vector<16x32xf32>
    %90 = arith.truncf %89 : vector<16x32xf32> to vector<16x32xbf16>
    %c0_27 = arith.constant 0 : index
    %c64 = arith.constant 64 : index
    %91 = vector.load %arg23[%c0_27, %c64] : memref<16x128xbf16, #tpu.memory_space<vmem>>, vector<16x32xbf16>
    tpu.vector_store %arg23[%c0_27, %c64], %90 {strides = array<i32>} : memref<16x128xbf16, #tpu.memory_space<vmem>>, vector<16x32xbf16>,
    %92 = vector.extract_strided_slice %15 {offsets = [0, 0, 96], sizes = [2, 8, 32], strides = [1, 1, 1]} : vector<2x8x128xf32> to vector<2x8x32xf32>
    %93 = arith.truncf %92 : vector<2x8x32xf32> to vector<2x8x32xbf16>
    %94 = vector.extract_strided_slice %17 {offsets = [0, 0, 96], sizes = [2, 8, 32], strides = [1, 1, 1]} : vector<2x8x128xf32> to vector<2x8x32xf32>
    %95 = arith.truncf %94 : vector<2x8x32xf32> to vector<2x8x32xbf16>
    %96 = vector.extract_strided_slice %19 {offsets = [0, 0, 96], sizes = [2, 8, 32], strides = [1, 1, 1]} : vector<2x8x128xf32> to vector<2x8x32xf32>
    %97 = arith.truncf %96 : vector<2x8x32xf32> to vector<2x8x32xbf16>
    "tpu.trace_start"() <{level = 10 : i32, message = "bqd,bkd->bqk"}> : () -> ()
    %cst_28 = arith.constant dense<0.000000e+00> : vector<2x8x8xf32>
    %98 = tpu.matmul %93, %95, %cst_28 {dimension_numbers = #tpu.dot_dimension_numbers<[2], [2], [1], [1], [0, 0, 0, 1, 1, 1], [0], [0]>} : vector<2x8x32xbf16>, vector<2x8x32xbf16>, vector<2x8x8xf32> -> vector<2x8x8xf32>
    "tpu.trace_stop"() : () -> ()
    %99 = vector.broadcast %4 : vector<2x1x8xf32> to vector<2x8x8xf32>
    %100 = arith.addf %98, %99 : vector<2x8x8xf32>
    %cst_29 = arith.constant dense<0xFF800000> : vector<2x8xf32>
    %101 = vector.multi_reduction <maximumf>, %100, %cst_29 [2] : vector<2x8x8xf32> to vector<2x8xf32>
    %102 = vector.shape_cast %101 : vector<2x8xf32> to vector<2x8x1xf32>
    %103 = vector.broadcast %102 : vector<2x8x1xf32> to vector<2x8x8xf32>
    %104 = arith.subf %100, %103 : vector<2x8x8xf32>
    %105 = math.exp %104 : vector<2x8x8xf32>
    %cst_30 = arith.constant dense<0.000000e+00> : vector<2x8xf32>
    %106 = vector.multi_reduction <add>, %105, %cst_30 [2] : vector<2x8x8xf32> to vector<2x8xf32>
    %107 = vector.shape_cast %106 : vector<2x8xf32> to vector<2x8x1xf32>
    %108 = tpu.reciprocal %107 {approx = true} : vector<2x8x1xf32> -> vector<2x8x1xf32>
    %109 = arith.truncf %105 : vector<2x8x8xf32> to vector<2x8x8xbf16>
    "tpu.trace_start"() <{level = 10 : i32, message = "bqk,bkd->bqd"}> : () -> ()
    %cst_31 = arith.constant dense<0.000000e+00> : vector<2x8x32xf32>
    %110 = tpu.matmul %109, %97, %cst_31 {dimension_numbers = #tpu.dot_dimension_numbers<[2], [1], [1], [2], [0, 0, 0, 1, 1, 2], [0], [0]>} : vector<2x8x8xbf16>, vector<2x8x32xbf16>, vector<2x8x32xf32> -> vector<2x8x32xf32>
    "tpu.trace_stop"() : () -> ()
    %111 = vector.broadcast %108 : vector<2x8x1xf32> to vector<2x8x32xf32>
    %112 = arith.mulf %110, %111 : vector<2x8x32xf32>
    %113 = vector.shape_cast %112 : vector<2x8x32xf32> to vector<16x32xf32>
    %114 = arith.truncf %113 : vector<16x32xf32> to vector<16x32xbf16>
    %c0_32 = arith.constant 0 : index
    %c96 = arith.constant 96 : index
    %115 = vector.load %arg23[%c0_32, %c96] : memref<16x128xbf16, #tpu.memory_space<vmem>>, vector<16x32xbf16>
    tpu.vector_store %arg23[%c0_32, %c96], %114 {strides = array<i32>} : memref<16x128xbf16, #tpu.memory_space<vmem>>, vector<16x32xbf16>,
    %c0_33 = arith.constant 0 : index
    %c0_34 = arith.constant 0 : index
    %116 = vector.load %arg23[%c0_33, %c0_34] : memref<16x128xbf16, #tpu.memory_space<vmem>>, vector<16x128xbf16>
    %c0_35 = arith.constant 0 : index
    %c0_36 = arith.constant 0 : index
    %c0_37 = arith.constant 0 : index
    %117 = vector.load %arg7[%c0_35, %c0_36, %c0_37] : memref<1x128x128xbf16, #tpu.memory_space<vmem>>, vector<1x128x128xbf16>
    %118 = vector.shape_cast %117 : vector<1x128x128xbf16> to vector<128x128xbf16>
    %cst_38 = arith.constant dense<0.000000e+00> : vector<16x128xf32>
    %119 = tpu.matmul %116, %118, %cst_38 {dimension_numbers = #tpu.dot_dimension_numbers<[1], [0], [0], [1], [0, 0, 1, 1], [], []>} : vector<16x128xbf16>, vector<128x128xbf16>, vector<16x128xf32> -> vector<16x128xf32>
    %c0_39 = arith.constant 0 : index
    %c0_40 = arith.constant 0 : index
    %c0_41 = arith.constant 0 : index
    %120 = vector.load %arg8[%c0_39, %c0_40, %c0_41] : memref<1x1x128xf32, #tpu.memory_space<vmem>>, vector<1x1x128xf32>
    %121 = vector.shape_cast %120 : vector<1x1x128xf32> to vector<1x128xf32>
    %122 = vector.broadcast %121 : vector<1x128xf32> to vector<16x128xf32>
    %123 = arith.addf %119, %122 : vector<16x128xf32>
    %124 = vector.shape_cast %123 : vector<16x128xf32> to vector<2x8x128xf32>
    %125 = arith.addf %3, %124 : vector<2x8x128xf32>
    %c0_42 = arith.constant 0 : index
    %c0_43 = arith.constant 0 : index
    %c0_44 = arith.constant 0 : index
    %126 = vector.load %arg9[%c0_42, %c0_43, %c0_44] : memref<1x1x128xf32, #tpu.memory_space<vmem>>, vector<1x1x128xf32>
    %127 = vector.shape_cast %126 : vector<1x1x128xf32> to vector<1x128xf32>
    %c0_45 = arith.constant 0 : index
    %c0_46 = arith.constant 0 : index
    %c0_47 = arith.constant 0 : index
    %128 = vector.load %arg10[%c0_45, %c0_46, %c0_47] : memref<1x1x128xf32, #tpu.memory_space<vmem>>, vector<1x1x128xf32>
    %129 = vector.shape_cast %128 : vector<1x1x128xf32> to vector<1x128xf32>
    %cst_48 = arith.constant dense<0.000000e+00> : vector<2x8xf32>
    %130 = vector.multi_reduction <add>, %125, %cst_48 [2] : vector<2x8x128xf32> to vector<2x8xf32>
    %131 = vector.shape_cast %130 : vector<2x8xf32> to vector<2x8x1xf32>
    %cst_49 = arith.constant 1.280000e+02 : f32
    %132 = vector.broadcast %cst_49 : f32 to vector<2x8x1xf32>
    %133 = arith.divf %131, %132 : vector<2x8x1xf32>
    %134 = arith.mulf %125, %125 : vector<2x8x128xf32>
    %cst_50 = arith.constant dense<0.000000e+00> : vector<2x8xf32>
    %135 = vector.multi_reduction <add>, %134, %cst_50 [2] : vector<2x8x128xf32> to vector<2x8xf32>
    %136 = vector.shape_cast %135 : vector<2x8xf32> to vector<2x8x1xf32>
    %cst_51 = arith.constant 1.280000e+02 : f32
    %137 = vector.broadcast %cst_51 : f32 to vector<2x8x1xf32>
    %138 = arith.divf %136, %137 : vector<2x8x1xf32>
    %139 = arith.mulf %133, %133 : vector<2x8x1xf32>
    %140 = arith.subf %138, %139 : vector<2x8x1xf32>
    %141 = vector.broadcast %133 : vector<2x8x1xf32> to vector<2x8x128xf32>
    %142 = arith.subf %125, %141 : vector<2x8x128xf32>
    %cst_52 = arith.constant 9.99999996E-13 : f32
    %143 = vector.broadcast %cst_52 : f32 to vector<2x8x1xf32>
    %144 = arith.addf %140, %143 : vector<2x8x1xf32>
    %145 = math.rsqrt %144 : vector<2x8x1xf32>
    %146 = vector.broadcast %145 : vector<2x8x1xf32> to vector<2x8x128xf32>
    %147 = arith.mulf %142, %146 : vector<2x8x128xf32>
    %148 = vector.shape_cast %127 : vector<1x128xf32> to vector<1x1x128xf32>
    %149 = vector.broadcast %148 : vector<1x1x128xf32> to vector<2x8x128xf32>
    %150 = arith.mulf %147, %149 : vector<2x8x128xf32>
    %151 = vector.shape_cast %129 : vector<1x128xf32> to vector<1x1x128xf32>
    %152 = vector.broadcast %151 : vector<1x1x128xf32> to vector<2x8x128xf32>
    %153 = arith.addf %150, %152 : vector<2x8x128xf32>
    %154 = vector.shape_cast %153 : vector<2x8x128xf32> to vector<16x128xf32>
    %155 = arith.truncf %154 : vector<16x128xf32> to vector<16x128xbf16>
    %c0_53 = arith.constant 0 : index
    %c0_54 = arith.constant 0 : index
    %c0_55 = arith.constant 0 : index
    %156 = vector.load %arg11[%c0_53, %c0_54, %c0_55] : memref<1x128x256xbf16, #tpu.memory_space<vmem>>, vector<1x128x256xbf16>
    %157 = vector.shape_cast %156 : vector<1x128x256xbf16> to vector<128x256xbf16>
    %cst_56 = arith.constant dense<0.000000e+00> : vector<16x256xf32>
    %158 = tpu.matmul %155, %157, %cst_56 {dimension_numbers = #tpu.dot_dimension_numbers<[1], [0], [0], [1], [0, 0, 1, 1], [], []>} : vector<16x128xbf16>, vector<128x256xbf16>, vector<16x256xf32> -> vector<16x256xf32>
    %c0_57 = arith.constant 0 : index
    %c0_58 = arith.constant 0 : index
    %c0_59 = arith.constant 0 : index
    %159 = vector.load %arg12[%c0_57, %c0_58, %c0_59] : memref<1x1x256xf32, #tpu.memory_space<vmem>>, vector<1x1x256xf32>
    %160 = vector.shape_cast %159 : vector<1x1x256xf32> to vector<1x256xf32>
    %161 = vector.broadcast %160 : vector<1x256xf32> to vector<16x256xf32>
    %162 = arith.addf %158, %161 : vector<16x256xf32>
    %163 = arith.mulf %162, %162 : vector<16x256xf32>
    %164 = arith.mulf %162, %163 : vector<16x256xf32>
    %cst_60 = arith.constant 4.471500e-02 : f32
    %165 = vector.broadcast %cst_60 : f32 to vector<16x256xf32>
    %166 = arith.mulf %165, %164 : vector<16x256xf32>
    %167 = arith.addf %162, %166 : vector<16x256xf32>
    %cst_61 = arith.constant 0.797884583 : f32
    %168 = vector.broadcast %cst_61 : f32 to vector<16x256xf32>
    %169 = arith.mulf %168, %167 : vector<16x256xf32>
    %170 = math.tanh %169 : vector<16x256xf32>
    %cst_62 = arith.constant 1.000000e+00 : f32
    %171 = vector.broadcast %cst_62 : f32 to vector<16x256xf32>
    %172 = arith.addf %171, %170 : vector<16x256xf32>
    %cst_63 = arith.constant 5.000000e-01 : f32
    %173 = vector.broadcast %cst_63 : f32 to vector<16x256xf32>
    %174 = arith.mulf %173, %172 : vector<16x256xf32>
    %175 = arith.mulf %162, %174 : vector<16x256xf32>
    %176 = arith.truncf %175 : vector<16x256xf32> to vector<16x256xbf16>
    %c0_64 = arith.constant 0 : index
    %c0_65 = arith.constant 0 : index
    %c0_66 = arith.constant 0 : index
    %177 = vector.load %arg13[%c0_64, %c0_65, %c0_66] : memref<1x256x128xbf16, #tpu.memory_space<vmem>>, vector<1x256x128xbf16>
    %178 = vector.shape_cast %177 : vector<1x256x128xbf16> to vector<256x128xbf16>
    %cst_67 = arith.constant dense<0.000000e+00> : vector<16x128xf32>
    %179 = tpu.matmul %176, %178, %cst_67 {dimension_numbers = #tpu.dot_dimension_numbers<[1], [0], [0], [1], [0, 0, 1, 1], [], []>} : vector<16x256xbf16>, vector<256x128xbf16>, vector<16x128xf32> -> vector<16x128xf32>
    %c0_68 = arith.constant 0 : index
    %c0_69 = arith.constant 0 : index
    %c0_70 = arith.constant 0 : index
    %180 = vector.load %arg14[%c0_68, %c0_69, %c0_70] : memref<1x1x128xf32, #tpu.memory_space<vmem>>, vector<1x1x128xf32>
    %181 = vector.shape_cast %180 : vector<1x1x128xf32> to vector<1x128xf32>
    %182 = vector.broadcast %181 : vector<1x128xf32> to vector<16x128xf32>
    %183 = arith.addf %179, %182 : vector<16x128xf32>
    %184 = vector.shape_cast %183 : vector<16x128xf32> to vector<2x8x128xf32>
    %185 = arith.addf %153, %184 : vector<2x8x128xf32>
    %c0_71 = arith.constant 0 : index
    %c0_72 = arith.constant 0 : index
    %c0_73 = arith.constant 0 : index
    %186 = vector.load %arg15[%c0_71, %c0_72, %c0_73] : memref<1x1x128xf32, #tpu.memory_space<vmem>>, vector<1x1x128xf32>
    %187 = vector.shape_cast %186 : vector<1x1x128xf32> to vector<1x128xf32>
    %c0_74 = arith.constant 0 : index
    %c0_75 = arith.constant 0 : index
    %c0_76 = arith.constant 0 : index
    %188 = vector.load %arg16[%c0_74, %c0_75, %c0_76] : memref<1x1x128xf32, #tpu.memory_space<vmem>>, vector<1x1x128xf32>
    %189 = vector.shape_cast %188 : vector<1x1x128xf32> to vector<1x128xf32>
    %cst_77 = arith.constant dense<0.000000e+00> : vector<2x8xf32>
    %190 = vector.multi_reduction <add>, %185, %cst_77 [2] : vector<2x8x128xf32> to vector<2x8xf32>
    %191 = vector.shape_cast %190 : vector<2x8xf32> to vector<2x8x1xf32>
    %cst_78 = arith.constant 1.280000e+02 : f32
    %192 = vector.broadcast %cst_78 : f32 to vector<2x8x1xf32>
    %193 = arith.divf %191, %192 : vector<2x8x1xf32>
    %194 = arith.mulf %185, %185 : vector<2x8x128xf32>
    %cst_79 = arith.constant dense<0.000000e+00> : vector<2x8xf32>
    %195 = vector.multi_reduction <add>, %194, %cst_79 [2] : vector<2x8x128xf32> to vector<2x8xf32>
    %196 = vector.shape_cast %195 : vector<2x8xf32> to vector<2x8x1xf32>
    %cst_80 = arith.constant 1.280000e+02 : f32
    %197 = vector.broadcast %cst_80 : f32 to vector<2x8x1xf32>
    %198 = arith.divf %196, %197 : vector<2x8x1xf32>
    %199 = arith.mulf %193, %193 : vector<2x8x1xf32>
    %200 = arith.subf %198, %199 : vector<2x8x1xf32>
    %201 = vector.broadcast %193 : vector<2x8x1xf32> to vector<2x8x128xf32>
    %202 = arith.subf %185, %201 : vector<2x8x128xf32>
    %cst_81 = arith.constant 9.99999996E-13 : f32
    %203 = vector.broadcast %cst_81 : f32 to vector<2x8x1xf32>
    %204 = arith.addf %200, %203 : vector<2x8x1xf32>
    %205 = math.rsqrt %204 : vector<2x8x1xf32>
    %206 = vector.broadcast %205 : vector<2x8x1xf32> to vector<2x8x128xf32>
    %207 = arith.mulf %202, %206 : vector<2x8x128xf32>
    %208 = vector.shape_cast %187 : vector<1x128xf32> to vector<1x1x128xf32>
    %209 = vector.broadcast %208 : vector<1x1x128xf32> to vector<2x8x128xf32>
    %210 = arith.mulf %207, %209 : vector<2x8x128xf32>
    %211 = vector.shape_cast %189 : vector<1x128xf32> to vector<1x1x128xf32>
    %212 = vector.broadcast %211 : vector<1x1x128xf32> to vector<2x8x128xf32>
    %213 = arith.addf %210, %212 : vector<2x8x128xf32>
    %c0_82 = arith.constant 0 : index
    %c0_83 = arith.constant 0 : index
    %c0_84 = arith.constant 0 : index
    %214 = vector.load %arg22[%c0_82, %c0_83, %c0_84] : memref<2x8x128xf32, #tpu.memory_space<vmem>>, vector<2x8x128xf32>
    tpu.vector_store %arg22[%c0_82, %c0_83, %c0_84], %213 {strides = array<i32>} : memref<2x8x128xf32, #tpu.memory_space<vmem>>, vector<2x8x128xf32>,
    %c1_i32 = arith.constant 1 : i32
    %215 = arith.cmpi eq, %arg0, %c1_i32 : i32
    %216 = arith.extui %215 : i1 to i32
    %c0_i32_85 = arith.constant 0 : i32
    %217 = arith.cmpi ne, %216, %c0_i32_85 : i32
    scf.if %217 {
      %218 = vector.extract_strided_slice %213 {offsets = [0, 0, 0], sizes = [2, 1, 128], strides = [1, 1, 1]} : vector<2x8x128xf32> to vector<2x1x128xf32>
      %219 = vector.shape_cast %218 : vector<2x1x128xf32> to vector<2x128xf32>
      %220 = arith.truncf %219 : vector<2x128xf32> to vector<2x128xbf16>
      %c0_86 = arith.constant 0 : index
      %c0_87 = arith.constant 0 : index
      %221 = vector.load %arg17[%c0_86, %c0_87] : memref<128x128xbf16, #tpu.memory_space<vmem>>, vector<128x128xbf16>
      %cst_88 = arith.constant dense<0.000000e+00> : vector<2x128xf32>
      %222 = tpu.matmul %220, %221, %cst_88 {dimension_numbers = #tpu.dot_dimension_numbers<[1], [0], [0], [1], [0, 0, 1, 1], [], []>} : vector<2x128xbf16>, vector<128x128xbf16>, vector<2x128xf32> -> vector<2x128xf32>
      %c0_89 = arith.constant 0 : index
      %c0_90 = arith.constant 0 : index
      %223 = vector.load %arg18[%c0_89, %c0_90] : memref<1x128xf32, #tpu.memory_space<vmem>>, vector<1x128xf32>
      %224 = vector.broadcast %223 : vector<1x128xf32> to vector<2x128xf32>
      %225 = arith.addf %222, %224 : vector<2x128xf32>
      %226 = math.tanh %225 : vector<2x128xf32>
      %227 = arith.truncf %226 : vector<2x128xf32> to vector<2x128xbf16>
      %c0_91 = arith.constant 0 : index
      %c0_92 = arith.constant 0 : index
      %228 = vector.load %arg19[%c0_91, %c0_92] : memref<128x128xbf16, #tpu.memory_space<vmem>>, vector<128x128xbf16>
      %cst_93 = arith.constant dense<0.000000e+00> : vector<2x128xf32>
      %229 = tpu.matmul %227, %228, %cst_93 {dimension_numbers = #tpu.dot_dimension_numbers<[1], [0], [0], [1], [0, 0, 1, 1], [], []>} : vector<2x128xbf16>, vector<128x128xbf16>, vector<2x128xf32> -> vector<2x128xf32>
      %c0_94 = arith.constant 0 : index
      %c0_95 = arith.constant 0 : index
      %230 = vector.load %arg20[%c0_94, %c0_95] : memref<1x128xf32, #tpu.memory_space<vmem>>, vector<1x128xf32>
      %231 = vector.broadcast %230 : vector<1x128xf32> to vector<2x128xf32>
      %232 = arith.addf %229, %231 : vector<2x128xf32>
      %c0_96 = arith.constant 0 : index
      %c0_97 = arith.constant 0 : index
      %233 = vector.load %arg21[%c0_96, %c0_97] : memref<2x128xf32, #tpu.memory_space<vmem>>, vector<2x128xf32>
      tpu.vector_store %arg21[%c0_96, %c0_97], %232 {strides = array<i32>} : memref<2x128xf32, #tpu.memory_space<vmem>>, vector<2x128xf32>,
    } else {
    }
    return
  }
  func.func @transform_0(%arg0: i32) -> (i32, i32, i32) {
    %c0_i32 = arith.constant 0 : i32
    %c0_i32_0 = arith.constant 0 : i32
    %c0_i32_1 = arith.constant 0 : i32
    %c0_i32_2 = arith.constant 0 : i32
    return %c0_i32, %c0_i32_0, %c0_i32_1 : i32, i32, i32
  }
  func.func @transform_1(%arg0: i32) -> (i32, i32, i32) {
    %c0_i32 = arith.constant 0 : i32
    %c0_i32_0 = arith.constant 0 : i32
    %c0_i32_1 = arith.constant 0 : i32
    %c0_i32_2 = arith.constant 0 : i32
    return %c0_i32, %c0_i32_0, %c0_i32_1 : i32, i32, i32
  }
  func.func @transform_2(%arg0: i32) -> (i32, i32) {
    %c0_i32 = arith.constant 0 : i32
    %c0_i32_0 = arith.constant 0 : i32
    %c0_i32_1 = arith.constant 0 : i32
    return %c0_i32, %c0_i32_0 : i32, i32
  }
  func.func @transform_3(%arg0: i32) -> (i32, i32) {
    %c0_i32 = arith.constant 0 : i32
    %c0_i32_0 = arith.constant 0 : i32
    %c0_i32_1 = arith.constant 0 : i32
    return %c0_i32, %c0_i32_0 : i32, i32
  }
  func.func @transform_4(%arg0: i32) -> (i32, i32, i32) {
    %c0_i32 = arith.constant 0 : i32
    %c0_i32_0 = arith.constant 0 : i32
    %c0_i32_1 = arith.constant 0 : i32
    return %arg0, %c0_i32, %c0_i32_0 : i32, i32, i32
  }
  func.func @transform_5(%arg0: i32) -> (i32, i32, i32) {
    %c0_i32 = arith.constant 0 : i32
    %c0_i32_0 = arith.constant 0 : i32
    %c0_i32_1 = arith.constant 0 : i32
    return %arg0, %c0_i32, %c0_i32_0 : i32, i32, i32
  }
  func.func @transform_6(%arg0: i32) -> (i32, i32, i32) {
    %c0_i32 = arith.constant 0 : i32
    %c0_i32_0 = arith.constant 0 : i32
    %c0_i32_1 = arith.constant 0 : i32
    return %arg0, %c0_i32, %c0_i32_0 : i32, i32, i32
  }
  func.func @transform_7(%arg0: i32) -> (i32, i32, i32) {
    %c0_i32 = arith.constant 0 : i32
    %c0_i32_0 = arith.constant 0 : i32
    %c0_i32_1 = arith.constant 0 : i32
    return %arg0, %c0_i32, %c0_i32_0 : i32, i32, i32
  }
  func.func @transform_8(%arg0: i32) -> (i32, i32, i32) {
    %c0_i32 = arith.constant 0 : i32
    %c0_i32_0 = arith.constant 0 : i32
    %c0_i32_1 = arith.constant 0 : i32
    return %arg0, %c0_i32, %c0_i32_0 : i32, i32, i32
  }
  func.func @transform_9(%arg0: i32) -> (i32, i32, i32) {
    %c0_i32 = arith.constant 0 : i32
    %c0_i32_0 = arith.constant 0 : i32
    %c0_i32_1 = arith.constant 0 : i32
    return %arg0, %c0_i32, %c0_i32_0 : i32, i32, i32
  }
  func.func @transform_10(%arg0: i32) -> (i32, i32, i32) {
    %c0_i32 = arith.constant 0 : i32
    %c0_i32_0 = arith.constant 0 : i32
    %c0_i32_1 = arith.constant 0 : i32
    return %arg0, %c0_i32, %c0_i32_0 : i32, i32, i32
  }
  func.func @transform_11(%arg0: i32) -> (i32, i32, i32) {
    %c0_i32 = arith.constant 0 : i32
    %c0_i32_0 = arith.constant 0 : i32
    %c0_i32_1 = arith.constant 0 : i32
    return %arg0, %c0_i32, %c0_i32_0 : i32, i32, i32
  }
  func.func @transform_12(%arg0: i32) -> (i32, i32, i32) {
    %c0_i32 = arith.constant 0 : i32
    %c0_i32_0 = arith.constant 0 : i32
    %c0_i32_1 = arith.constant 0 : i32
    return %arg0, %c0_i32, %c0_i32_0 : i32, i32, i32
  }
  func.func @transform_13(%arg0: i32) -> (i32, i32, i32) {
    %c0_i32 = arith.constant 0 : i32
    %c0_i32_0 = arith.constant 0 : i32
    %c0_i32_1 = arith.constant 0 : i32
    return %arg0, %c0_i32, %c0_i32_0 : i32, i32, i32
  }
  func.func @transform_14(%arg0: i32) -> (i32, i32, i32) {
    %c0_i32 = arith.constant 0 : i32
    %c0_i32_0 = arith.constant 0 : i32
    %c0_i32_1 = arith.constant 0 : i32
    return %arg0, %c0_i32, %c0_i32_0 : i32, i32, i32
  }
  func.func @transform_15(%arg0: i32) -> (i32, i32, i32) {
    %c0_i32 = arith.constant 0 : i32
    %c0_i32_0 = arith.constant 0 : i32
    %c0_i32_1 = arith.constant 0 : i32
    return %arg0, %c0_i32, %c0_i32_0 : i32, i32, i32
  }
  func.func @transform_16(%arg0: i32) -> (i32, i32) {
    %c0_i32 = arith.constant 0 : i32
    %c0_i32_0 = arith.constant 0 : i32
    %c0_i32_1 = arith.constant 0 : i32
    return %c0_i32, %c0_i32_0 : i32, i32
  }
  func.func @transform_17(%arg0: i32) -> (i32, i32) {
    %c0_i32 = arith.constant 0 : i32
    %c0_i32_0 = arith.constant 0 : i32
    %c0_i32_1 = arith.constant 0 : i32
    return %c0_i32, %c0_i32_0 : i32, i32
  }
  func.func @transform_18(%arg0: i32) -> (i32, i32) {
    %c0_i32 = arith.constant 0 : i32
    %c0_i32_0 = arith.constant 0 : i32
    %c0_i32_1 = arith.constant 0 : i32
    return %c0_i32, %c0_i32_0 : i32, i32
  }
  func.func @transform_19(%arg0: i32) -> (i32, i32) {
    %c0_i32 = arith.constant 0 : i32
    %c0_i32_0 = arith.constant 0 : i32
    %c0_i32_1 = arith.constant 0 : i32
    return %c0_i32, %c0_i32_0 : i32, i32
  }
  func.func @transform_20(%arg0: i32) -> (i32, i32) {
    %c0_i32 = arith.constant 0 : i32
    %c0_i32_0 = arith.constant 0 : i32
    %c0_i32_1 = arith.constant 0 : i32
    return %c0_i32, %c0_i32_0 : i32, i32
  }
}

</mosaic_0001>

<llo_original>
// kernel: bert_for_relations_forward.1
$region0: #{bert_for_relations_forward.1}
  #allocation0 [shape = 'u32[]', space=smem, size = 0x4, offset = 0x4, fixed_abs, tag = 'smem constant byte address 0x4 - core index']
  #allocation1 [shape = 'u32[72,128]{1,0:T(1,128)}', space=vmem, size = 0x9000, scoped, tag = 'internal scratch']
  #allocation2 [shape = 'f32[2,8,128]{2,1,0:T(8,128)}', space=vmem, size = 0x2000, scoped, tag = 'scratch operand']
  #allocation3 [shape = 'bf16[16,128]{1,0:T(8,128)(2,1)}', space=vmem, size = 0x1000, scoped, tag = 'scratch operand']
  %s0 = inlined_call_operand.vmem [shape: f32[2,8,128], index: 0, kind: input, shape index: {}]
  %s1 = inlined_call_operand.vmem [shape: f32[2,1,8], index: 1, kind: input, shape index: {}]
  %s2 = inlined_call_operand.vmem [shape: f32[1,128], index: 2, kind: input, shape index: {}]
  %s3 = inlined_call_operand.vmem [shape: f32[1,128], index: 3, kind: input, shape index: {}]
  %s4 = inlined_call_operand.vmem [shape: bf16[2,128,384], index: 4, kind: input, shape index: {}]
  %s5 = inlined_call_operand.vmem [shape: f32[2,1,384], index: 5, kind: input, shape index: {}]
  %s6 = inlined_call_operand.vmem [shape: bf16[2,128,128], index: 6, kind: input, shape index: {}]
  %s7 = inlined_call_operand.vmem [shape: f32[2,1,128], index: 7, kind: input, shape index: {}]
  %s8 = inlined_call_operand.vmem [shape: f32[2,1,128], index: 8, kind: input, shape index: {}]
  %s9 = inlined_call_operand.vmem [shape: f32[2,1,128], index: 9, kind: input, shape index: {}]
  %s10 = inlined_call_operand.vmem [shape: bf16[2,128,256], index: 10, kind: input, shape index: {}]
  %s11 = inlined_call_operand.vmem [shape: f32[2,1,256], index: 11, kind: input, shape index: {}]
  %s12 = inlined_call_operand.vmem [shape: bf16[2,256,128], index: 12, kind: input, shape index: {}]
  %s13 = inlined_call_operand.vmem [shape: f32[2,1,128], index: 13, kind: input, shape index: {}]
  %s14 = inlined_call_operand.vmem [shape: f32[2,1,128], index: 14, kind: input, shape index: {}]
  %s15 = inlined_call_operand.vmem [shape: f32[2,1,128], index: 15, kind: input, shape index: {}]
  %s16 = inlined_call_operand.vmem [shape: bf16[128,128], index: 16, kind: input, shape index: {}]
  %s17 = inlined_call_operand.vmem [shape: f32[1,128], index: 17, kind: input, shape index: {}]
  %s18 = inlined_call_operand.vmem [shape: bf16[128,128], index: 18, kind: input, shape index: {}]
  %s19 = inlined_call_operand.vmem [shape: f32[1,128], index: 19, kind: input, shape index: {}]
  %s20 = inlined_call_operand.hbm [shape: f32[2,128], index: 20, kind: output, shape index: {}]
  %s21 = sld [smem:[#allocation0]]
  $region121: #{bert_for_relations_forward.1} parent=0
    _
  %s23 = ssub.s32 1, %s21
  %s24 = scalar_select 0, %s23, %s21
  $region1: #{bert_for_relations_forward.1} parent=0
    #allocation4 [shape = 'u8[1024]{0}', space=vmem, size = 0x400, scoped, tag = 'output window, operand 0, single buffered']
    #allocation5 [shape = 's32[2]{0}', space=sflag, size = 0x8, scoped, tag = 'scoped memory for bert_for_relations_forward.1']
    %25 = vsyncpa [#allocation5], 0
    loop: start=0, step=1, limit=4
    $region2: #{bert_for_relations_forward.1} parent=1 // loop_pre_header
      _
    $region3: #{bert_for_relations_forward.1} parent=1 // loop_header
      %s27 = sphi 0, %s31
      %p28 = scmp.ge.s32.totalorder %s27, 4
      %s35 = sphi 0, %s35
      %s37 = sphi 0, %s35
      %s38 = sphi 0, %s37
      %s52 = sphi 0, %s38
      %s56 = sphi 0, %s56
      %s58 = sphi 0, %s56
      %s59 = sphi 0, %s58
      %s73 = sphi 0, %s59
      %s77 = sphi 0, %s77
      %s79 = sphi 0, %s77
      %s80 = sphi 0, %s79
      %s94 = sphi 0, %s80
      %s98 = sphi 0, %s98
      %s100 = sphi 0, %s98
      %s101 = sphi 0, %s100
      %s115 = sphi 0, %s101
      %s121 = sphi 0, %s123
      %s124 = sphi 0, %s121
      %s125 = sphi 0, %s124
      %s141 = sphi 0, %s125
      %s147 = sphi 0, %s149
      %s150 = sphi 0, %s147
      %s151 = sphi 0, %s150
      %s167 = sphi 0, %s151
      %s173 = sphi 0, %s175
      %s176 = sphi 0, %s173
      %s177 = sphi 0, %s176
      %s193 = sphi 0, %s177
      %s199 = sphi 0, %s201
      %s202 = sphi 0, %s199
      %s203 = sphi 0, %s202
      %s219 = sphi 0, %s203
      %s225 = sphi 0, %s227
      %s228 = sphi 0, %s225
      %s229 = sphi 0, %s228
      %s245 = sphi 0, %s229
      %s251 = sphi 0, %s253
      %s254 = sphi 0, %s251
      %s255 = sphi 0, %s254
      %s271 = sphi 0, %s255
      %s277 = sphi 0, %s279
      %s280 = sphi 0, %s277
      %s281 = sphi 0, %s280
      %s297 = sphi 0, %s281
      %s303 = sphi 0, %s305
      %s306 = sphi 0, %s303
      %s307 = sphi 0, %s306
      %s323 = sphi 0, %s307
      %s329 = sphi 0, %s331
      %s332 = sphi 0, %s329
      %s333 = sphi 0, %s332
      %s349 = sphi 0, %s333
      %s355 = sphi 0, %s357
      %s358 = sphi 0, %s355
      %s359 = sphi 0, %s358
      %s375 = sphi 0, %s359
      %s381 = sphi 0, %s383
      %s384 = sphi 0, %s381
      %s385 = sphi 0, %s384
      %s401 = sphi 0, %s385
      %s407 = sphi 0, %s409
      %s410 = sphi 0, %s407
      %s411 = sphi 0, %s410
      %s427 = sphi 0, %s411
      %s431 = sphi 0, %s431
      %s433 = sphi 0, %s431
      %s434 = sphi 0, %s433
      %s448 = sphi 0, %s434
      %s452 = sphi 0, %s452
      %s454 = sphi 0, %s452
      %s455 = sphi 0, %s454
      %s469 = sphi 0, %s455
      %s473 = sphi 0, %s473
      %s475 = sphi 0, %s473
      %s476 = sphi 0, %s475
      %s490 = sphi 0, %s476
      %s494 = sphi 0, %s494
      %s496 = sphi 0, %s494
      %s497 = sphi 0, %s496
      %s511 = sphi 0, %s497
      %s515 = sphi 0, %s515
      %s517 = sphi 0, %s515
      %s518 = sphi 0, %s517
      %s532 = sphi 0, %s518
    $region4: #{bert_for_relations_forward.1} parent=1 // loop_header_branch
      %30 = sbr.rel (%p28) target = $region8
    $region5: #{bert_for_relations_forward.1} parent=1 // loop_body
      %s32 = ssub.s32 %s27, 1
      %s33 = ssub.s32 %s27, 2
      %s34 = sadd.s32 %s27, 1
      %s36 = sadd.s32 %s35, 1
      %p39 = scmp.eq.s32.totalorder %s27, 1
      %p40 = scmp.ne.s32.totalorder %s35, %s37
      %p41 = scmp.eq.s32.totalorder %s27, 0
      %p42 = por %p40, %p41
      %p43 = scmp.ne.s32.totalorder %s35, %s37
      %p44 = scmp.eq.s32.totalorder %s32, 1
      %p45 = por %p43, %p44
      %p46 = scmp.ne.s32.totalorder %s37, %s38
      %p47 = scmp.eq.s32.totalorder %s32, 0
      %p48 = por %p46, %p47
      %p49 = scmp.ne.s32.totalorder %s37, %s38
      %p50 = scmp.eq.s32.totalorder %s33, 1
      %p51 = por %p49, %p50
      %p53 = scmp.ne.s32.totalorder %s38, %s52
      %p54 = scmp.eq.s32.totalorder %s33, 0
      %p55 = por %p53, %p54
      %s57 = sadd.s32 %s56, 1
      %p60 = scmp.eq.s32.totalorder %s27, 1
      %p61 = scmp.ne.s32.totalorder %s56, %s58
      %p62 = scmp.eq.s32.totalorder %s27, 0
      %p63 = por %p61, %p62
      %p64 = scmp.ne.s32.totalorder %s56, %s58
      %p65 = scmp.eq.s32.totalorder %s32, 1
      %p66 = por %p64, %p65
      %p67 = scmp.ne.s32.totalorder %s58, %s59
      %p68 = scmp.eq.s32.totalorder %s32, 0
      %p69 = por %p67, %p68
      %p70 = scmp.ne.s32.totalorder %s58, %s59
      %p71 = scmp.eq.s32.totalorder %s33, 1
      %p72 = por %p70, %p71
      %p74 = scmp.ne.s32.totalorder %s59, %s73
      %p75 = scmp.eq.s32.totalorder %s33, 0
      %p76 = por %p74, %p75
      %s78 = sadd.s32 %s77, 1
      %p81 = scmp.eq.s32.totalorder %s27, 1
      %p82 = scmp.ne.s32.totalorder %s77, %s79
      %p83 = scmp.eq.s32.totalorder %s27, 0
      %p84 = por %p82, %p83
      %p85 = scmp.ne.s32.totalorder %s77, %s79
      %p86 = scmp.eq.s32.totalorder %s32, 1
      %p87 = por %p85, %p86
      %p88 = scmp.ne.s32.totalorder %s79, %s80
      %p89 = scmp.eq.s32.totalorder %s32, 0
      %p90 = por %p88, %p89
      %p91 = scmp.ne.s32.totalorder %s79, %s80
      %p92 = scmp.eq.s32.totalorder %s33, 1
      %p93 = por %p91, %p92
      %p95 = scmp.ne.s32.totalorder %s80, %s94
      %p96 = scmp.eq.s32.totalorder %s33, 0
      %p97 = por %p95, %p96
      %s99 = sadd.s32 %s98, 1
      %p102 = scmp.eq.s32.totalorder %s27, 1
      %p103 = scmp.ne.s32.totalorder %s98, %s100
      %p104 = scmp.eq.s32.totalorder %s27, 0
      %p105 = por %p103, %p104
      %p106 = scmp.ne.s32.totalorder %s98, %s100
      %p107 = scmp.eq.s32.totalorder %s32, 1
      %p108 = por %p106, %p107
      %p109 = scmp.ne.s32.totalorder %s100, %s101
      %p110 = scmp.eq.s32.totalorder %s32, 0
      %p111 = por %p109, %p110
      %p112 = scmp.ne.s32.totalorder %s100, %s101
      %p113 = scmp.eq.s32.totalorder %s33, 1
      %p114 = por %p112, %p113
      %p116 = scmp.ne.s32.totalorder %s101, %s115
      %p117 = scmp.eq.s32.totalorder %s33, 0
      %p118 = por %p116, %p117
      %s119 = ssub.s32 %s27, %s34
      %p120 = scmp.eq.s32.totalorder %s119, 0
      %s122 = sadd.s32 %s121, 1
      %s123 = scalar_select %p120, %s121, %s122
      %p126 = pneg %p120
      %p127 = scmp.eq.s32.totalorder %s27, 1
      %p128 = por %p126, %p127
      %p129 = scmp.ne.s32.totalorder %s121, %s124
      %p130 = scmp.eq.s32.totalorder %s27, 0
      %p131 = por %p129, %p130
      %p132 = scmp.ne.s32.totalorder %s121, %s124
      %p133 = scmp.eq.s32.totalorder %s32, 1
      %p134 = por %p132, %p133
      %p135 = scmp.ne.s32.totalorder %s124, %s125
      %p136 = scmp.eq.s32.totalorder %s32, 0
      %p137 = por %p135, %p136
      %p138 = scmp.ne.s32.totalorder %s124, %s125
      %p139 = scmp.eq.s32.totalorder %s33, 1
      %p140 = por %p138, %p139
      %p142 = scmp.ne.s32.totalorder %s125, %s141
      %p143 = scmp.eq.s32.totalorder %s33, 0
      %p144 = por %p142, %p143
      %s145 = ssub.s32 %s27, %s34
      %p146 = scmp.eq.s32.totalorder %s145, 0
      %s148 = sadd.s32 %s147, 1
      %s149 = scalar_select %p146, %s147, %s148
      %p152 = pneg %p146
      %p153 = scmp.eq.s32.totalorder %s27, 1
      %p154 = por %p152, %p153
      %p155 = scmp.ne.s32.totalorder %s147, %s150
      %p156 = scmp.eq.s32.totalorder %s27, 0
      %p157 = por %p155, %p156
      %p158 = scmp.ne.s32.totalorder %s147, %s150
      %p159 = scmp.eq.s32.totalorder %s32, 1
      %p160 = por %p158, %p159
      %p161 = scmp.ne.s32.totalorder %s150, %s151
      %p162 = scmp.eq.s32.totalorder %s32, 0
      %p163 = por %p161, %p162
      %p164 = scmp.ne.s32.totalorder %s150, %s151
      %p165 = scmp.eq.s32.totalorder %s33, 1
      %p166 = por %p164, %p165
      %p168 = scmp.ne.s32.totalorder %s151, %s167
      %p169 = scmp.eq.s32.totalorder %s33, 0
      %p170 = por %p168, %p169
      %s171 = ssub.s32 %s27, %s34
      %p172 = scmp.eq.s32.totalorder %s171, 0
      %s174 = sadd.s32 %s173, 1
      %s175 = scalar_select %p172, %s173, %s174
      %p178 = pneg %p172
      %p179 = scmp.eq.s32.totalorder %s27, 1
      %p180 = por %p178, %p179
      %p181 = scmp.ne.s32.totalorder %s173, %s176
      %p182 = scmp.eq.s32.totalorder %s27, 0
      %p183 = por %p181, %p182
      %p184 = scmp.ne.s32.totalorder %s173, %s176
      %p185 = scmp.eq.s32.totalorder %s32, 1
      %p186 = por %p184, %p185
      %p187 = scmp.ne.s32.totalorder %s176, %s177
      %p188 = scmp.eq.s32.totalorder %s32, 0
      %p189 = por %p187, %p188
      %p190 = scmp.ne.s32.totalorder %s176, %s177
      %p191 = scmp.eq.s32.totalorder %s33, 1
      %p192 = por %p190, %p191
      %p194 = scmp.ne.s32.totalorder %s177, %s193
      %p195 = scmp.eq.s32.totalorder %s33, 0
      %p196 = por %p194, %p195
      %s197 = ssub.s32 %s27, %s34
      %p198 = scmp.eq.s32.totalorder %s197, 0
      %s200 = sadd.s32 %s199, 1
      %s201 = scalar_select %p198, %s199, %s200
      %p204 = pneg %p198
      %p205 = scmp.eq.s32.totalorder %s27, 1
      %p206 = por %p204, %p205
      %p207 = scmp.ne.s32.totalorder %s199, %s202
      %p208 = scmp.eq.s32.totalorder %s27, 0
      %p209 = por %p207, %p208
      %p210 = scmp.ne.s32.totalorder %s199, %s202
      %p211 = scmp.eq.s32.totalorder %s32, 1
      %p212 = por %p210, %p211
      %p213 = scmp.ne.s32.totalorder %s202, %s203
      %p214 = scmp.eq.s32.totalorder %s32, 0
      %p215 = por %p213, %p214
      %p216 = scmp.ne.s32.totalorder %s202, %s203
      %p217 = scmp.eq.s32.totalorder %s33, 1
      %p218 = por %p216, %p217
      %p220 = scmp.ne.s32.totalorder %s203, %s219
      %p221 = scmp.eq.s32.totalorder %s33, 0
      %p222 = por %p220, %p221
      %s223 = ssub.s32 %s27, %s34
      %p224 = scmp.eq.s32.totalorder %s223, 0
      %s226 = sadd.s32 %s225, 1
      %s227 = scalar_select %p224, %s225, %s226
      %p230 = pneg %p224
      %p231 = scmp.eq.s32.totalorder %s27, 1
      %p232 = por %p230, %p231
      %p233 = scmp.ne.s32.totalorder %s225, %s228
      %p234 = scmp.eq.s32.totalorder %s27, 0
      %p235 = por %p233, %p234
      %p236 = scmp.ne.s32.totalorder %s225, %s228
      %p237 = scmp.eq.s32.totalorder %s32, 1
      %p238 = por %p236, %p237
      %p239 = scmp.ne.s32.totalorder %s228, %s229
      %p240 = scmp.eq.s32.totalorder %s32, 0
      %p241 = por %p239, %p240
      %p242 = scmp.ne.s32.totalorder %s228, %s229
      %p243 = scmp.eq.s32.totalorder %s33, 1
      %p244 = por %p242, %p243
      %p246 = scmp.ne.s32.totalorder %s229, %s245
      %p247 = scmp.eq.s32.totalorder %s33, 0
      %p248 = por %p246, %p247
      %s249 = ssub.s32 %s27, %s34
      %p250 = scmp.eq.s32.totalorder %s249, 0
      %s252 = sadd.s32 %s251, 1
      %s253 = scalar_select %p250, %s251, %s252
      %p256 = pneg %p250
      %p257 = scmp.eq.s32.totalorder %s27, 1
      %p258 = por %p256, %p257
      %p259 = scmp.ne.s32.totalorder %s251, %s254
      %p260 = scmp.eq.s32.totalorder %s27, 0
      %p261 = por %p259, %p260
      %p262 = scmp.ne.s32.totalorder %s251, %s254
      %p263 = scmp.eq.s32.totalorder %s32, 1
      %p264 = por %p262, %p263
      %p265 = scmp.ne.s32.totalorder %s254, %s255
      %p266 = scmp.eq.s32.totalorder %s32, 0
      %p267 = por %p265, %p266
      %p268 = scmp.ne.s32.totalorder %s254, %s255
      %p269 = scmp.eq.s32.totalorder %s33, 1
      %p270 = por %p268, %p269
      %p272 = scmp.ne.s32.totalorder %s255, %s271
      %p273 = scmp.eq.s32.totalorder %s33, 0
      %p274 = por %p272, %p273
      %s275 = ssub.s32 %s27, %s34
      %p276 = scmp.eq.s32.totalorder %s275, 0
      %s278 = sadd.s32 %s277, 1
      %s279 = scalar_select %p276, %s277, %s278
      %p282 = pneg %p276
      %p283 = scmp.eq.s32.totalorder %s27, 1
      %p284 = por %p282, %p283
      %p285 = scmp.ne.s32.totalorder %s277, %s280
      %p286 = scmp.eq.s32.totalorder %s27, 0
      %p287 = por %p285, %p286
      %p288 = scmp.ne.s32.totalorder %s277, %s280
      %p289 = scmp.eq.s32.totalorder %s32, 1
      %p290 = por %p288, %p289
      %p291 = scmp.ne.s32.totalorder %s280, %s281
      %p292 = scmp.eq.s32.totalorder %s32, 0
      %p293 = por %p291, %p292
      %p294 = scmp.ne.s32.totalorder %s280, %s281
      %p295 = scmp.eq.s32.totalorder %s33, 1
      %p296 = por %p294, %p295
      %p298 = scmp.ne.s32.totalorder %s281, %s297
      %p299 = scmp.eq.s32.totalorder %s33, 0
      %p300 = por %p298, %p299
      %s301 = ssub.s32 %s27, %s34
      %p302 = scmp.eq.s32.totalorder %s301, 0
      %s304 = sadd.s32 %s303, 1
      %s305 = scalar_select %p302, %s303, %s304
      %p308 = pneg %p302
      %p309 = scmp.eq.s32.totalorder %s27, 1
      %p310 = por %p308, %p309
      %p311 = scmp.ne.s32.totalorder %s303, %s306
      %p312 = scmp.eq.s32.totalorder %s27, 0
      %p313 = por %p311, %p312
      %p314 = scmp.ne.s32.totalorder %s303, %s306
      %p315 = scmp.eq.s32.totalorder %s32, 1
      %p316 = por %p314, %p315
      %p317 = scmp.ne.s32.totalorder %s306, %s307
      %p318 = scmp.eq.s32.totalorder %s32, 0
      %p319 = por %p317, %p318
      %p320 = scmp.ne.s32.totalorder %s306, %s307
      %p321 = scmp.eq.s32.totalorder %s33, 1
      %p322 = por %p320, %p321
      %p324 = scmp.ne.s32.totalorder %s307, %s323
      %p325 = scmp.eq.s32.totalorder %s33, 0
      %p326 = por %p324, %p325
      %s327 = ssub.s32 %s27, %s34
      %p328 = scmp.eq.s32.totalorder %s327, 0
      %s330 = sadd.s32 %s329, 1
      %s331 = scalar_select %p328, %s329, %s330
      %p334 = pneg %p328
      %p335 = scmp.eq.s32.totalorder %s27, 1
      %p336 = por %p334, %p335
      %p337 = scmp.ne.s32.totalorder %s329, %s332
      %p338 = scmp.eq.s32.totalorder %s27, 0
      %p339 = por %p337, %p338
      %p340 = scmp.ne.s32.totalorder %s329, %s332
      %p341 = scmp.eq.s32.totalorder %s32, 1
      %p342 = por %p340, %p341
      %p343 = scmp.ne.s32.totalorder %s332, %s333
      %p344 = scmp.eq.s32.totalorder %s32, 0
      %p345 = por %p343, %p344
      %p346 = scmp.ne.s32.totalorder %s332, %s333
      %p347 = scmp.eq.s32.totalorder %s33, 1
      %p348 = por %p346, %p347
      %p350 = scmp.ne.s32.totalorder %s333, %s349
      %p351 = scmp.eq.s32.totalorder %s33, 0
      %p352 = por %p350, %p351
      %s353 = ssub.s32 %s27, %s34
      %p354 = scmp.eq.s32.totalorder %s353, 0
      %s356 = sadd.s32 %s355, 1
      %s357 = scalar_select %p354, %s355, %s356
      %p360 = pneg %p354
      %p361 = scmp.eq.s32.totalorder %s27, 1
      %p362 = por %p360, %p361
      %p363 = scmp.ne.s32.totalorder %s355, %s358
      %p364 = scmp.eq.s32.totalorder %s27, 0
      %p365 = por %p363, %p364
      %p366 = scmp.ne.s32.totalorder %s355, %s358
      %p367 = scmp.eq.s32.totalorder %s32, 1
      %p368 = por %p366, %p367
      %p369 = scmp.ne.s32.totalorder %s358, %s359
      %p370 = scmp.eq.s32.totalorder %s32, 0
      %p371 = por %p369, %p370
      %p372 = scmp.ne.s32.totalorder %s358, %s359
      %p373 = scmp.eq.s32.totalorder %s33, 1
      %p374 = por %p372, %p373
      %p376 = scmp.ne.s32.totalorder %s359, %s375
      %p377 = scmp.eq.s32.totalorder %s33, 0
      %p378 = por %p376, %p377
      %s379 = ssub.s32 %s27, %s34
      %p380 = scmp.eq.s32.totalorder %s379, 0
      %s382 = sadd.s32 %s381, 1
      %s383 = scalar_select %p380, %s381, %s382
      %p386 = pneg %p380
      %p387 = scmp.eq.s32.totalorder %s27, 1
      %p388 = por %p386, %p387
      %p389 = scmp.ne.s32.totalorder %s381, %s384
      %p390 = scmp.eq.s32.totalorder %s27, 0
      %p391 = por %p389, %p390
      %p392 = scmp.ne.s32.totalorder %s381, %s384
      %p393 = scmp.eq.s32.totalorder %s32, 1
      %p394 = por %p392, %p393
      %p395 = scmp.ne.s32.totalorder %s384, %s385
      %p396 = scmp.eq.s32.totalorder %s32, 0
      %p397 = por %p395, %p396
      %p398 = scmp.ne.s32.totalorder %s384, %s385
      %p399 = scmp.eq.s32.totalorder %s33, 1
      %p400 = por %p398, %p399
      %p402 = scmp.ne.s32.totalorder %s385, %s401
      %p403 = scmp.eq.s32.totalorder %s33, 0
      %p404 = por %p402, %p403
      %s405 = ssub.s32 %s27, %s34
      %p406 = scmp.eq.s32.totalorder %s405, 0
      %s408 = sadd.s32 %s407, 1
      %s409 = scalar_select %p406, %s407, %s408
      %p412 = pneg %p406
      %p413 = scmp.eq.s32.totalorder %s27, 1
      %p414 = por %p412, %p413
      %p415 = scmp.ne.s32.totalorder %s407, %s410
      %p416 = scmp.eq.s32.totalorder %s27, 0
      %p417 = por %p415, %p416
      %p418 = scmp.ne.s32.totalorder %s407, %s410
      %p419 = scmp.eq.s32.totalorder %s32, 1
      %p420 = por %p418, %p419
      %p421 = scmp.ne.s32.totalorder %s410, %s411
      %p422 = scmp.eq.s32.totalorder %s32, 0
      %p423 = por %p421, %p422
      %p424 = scmp.ne.s32.totalorder %s410, %s411
      %p425 = scmp.eq.s32.totalorder %s33, 1
      %p426 = por %p424, %p425
      %p428 = scmp.ne.s32.totalorder %s411, %s427
      %p429 = scmp.eq.s32.totalorder %s33, 0
      %p430 = por %p428, %p429
      %s432 = sadd.s32 %s431, 1
      %p435 = scmp.eq.s32.totalorder %s27, 1
      %p436 = scmp.ne.s32.totalorder %s431, %s433
      %p437 = scmp.eq.s32.totalorder %s27, 0
      %p438 = por %p436, %p437
      %p439 = scmp.ne.s32.totalorder %s431, %s433
      %p440 = scmp.eq.s32.totalorder %s32, 1
      %p441 = por %p439, %p440
      %p442 = scmp.ne.s32.totalorder %s433, %s434
      %p443 = scmp.eq.s32.totalorder %s32, 0
      %p444 = por %p442, %p443
      %p445 = scmp.ne.s32.totalorder %s433, %s434
      %p446 = scmp.eq.s32.totalorder %s33, 1
      %p447 = por %p445, %p446
      %p449 = scmp.ne.s32.totalorder %s434, %s448
      %p450 = scmp.eq.s32.totalorder %s33, 0
      %p451 = por %p449, %p450
      %s453 = sadd.s32 %s452, 1
      %p456 = scmp.eq.s32.totalorder %s27, 1
      %p457 = scmp.ne.s32.totalorder %s452, %s454
      %p458 = scmp.eq.s32.totalorder %s27, 0
      %p459 = por %p457, %p458
      %p460 = scmp.ne.s32.totalorder %s452, %s454
      %p461 = scmp.eq.s32.totalorder %s32, 1
      %p462 = por %p460, %p461
      %p463 = scmp.ne.s32.totalorder %s454, %s455
      %p464 = scmp.eq.s32.totalorder %s32, 0
      %p465 = por %p463, %p464
      %p466 = scmp.ne.s32.totalorder %s454, %s455
      %p467 = scmp.eq.s32.totalorder %s33, 1
      %p468 = por %p466, %p467
      %p470 = scmp.ne.s32.totalorder %s455, %s469
      %p471 = scmp.eq.s32.totalorder %s33, 0
      %p472 = por %p470, %p471
      %s474 = sadd.s32 %s473, 1
      %p477 = scmp.eq.s32.totalorder %s27, 1
      %p478 = scmp.ne.s32.totalorder %s473, %s475
      %p479 = scmp.eq.s32.totalorder %s27, 0
      %p480 = por %p478, %p479
      %p481 = scmp.ne.s32.totalorder %s473, %s475
      %p482 = scmp.eq.s32.totalorder %s32, 1
      %p483 = por %p481, %p482
      %p484 = scmp.ne.s32.totalorder %s475, %s476
      %p485 = scmp.eq.s32.totalorder %s32, 0
      %p486 = por %p484, %p485
      %p487 = scmp.ne.s32.totalorder %s475, %s476
      %p488 = scmp.eq.s32.totalorder %s33, 1
      %p489 = por %p487, %p488
      %p491 = scmp.ne.s32.totalorder %s476, %s490
      %p492 = scmp.eq.s32.totalorder %s33, 0
      %p493 = por %p491, %p492
      %s495 = sadd.s32 %s494, 1
      %p498 = scmp.eq.s32.totalorder %s27, 1
      %p499 = scmp.ne.s32.totalorder %s494, %s496
      %p500 = scmp.eq.s32.totalorder %s27, 0
      %p501 = por %p499, %p500
      %p502 = scmp.ne.s32.totalorder %s494, %s496
      %p503 = scmp.eq.s32.totalorder %s32, 1
      %p504 = por %p502, %p503
      %p505 = scmp.ne.s32.totalorder %s496, %s497
      %p506 = scmp.eq.s32.totalorder %s32, 0
      %p507 = por %p505, %p506
      %p508 = scmp.ne.s32.totalorder %s496, %s497
      %p509 = scmp.eq.s32.totalorder %s33, 1
      %p510 = por %p508, %p509
      %p512 = scmp.ne.s32.totalorder %s497, %s511
      %p513 = scmp.eq.s32.totalorder %s33, 0
      %p514 = por %p512, %p513
      %s516 = sadd.s32 %s515, 1
      %p519 = scmp.eq.s32.totalorder %s27, 1
      %p520 = scmp.ne.s32.totalorder %s515, %s517
      %p521 = scmp.eq.s32.totalorder %s27, 0
      %p522 = por %p520, %p521
      %p523 = scmp.ne.s32.totalorder %s515, %s517
      %p524 = scmp.eq.s32.totalorder %s32, 1
      %p525 = por %p523, %p524
      %p526 = scmp.ne.s32.totalorder %s517, %s518
      %p527 = scmp.eq.s32.totalorder %s32, 0
      %p528 = por %p526, %p527
      %p529 = scmp.ne.s32.totalorder %s517, %s518
      %p530 = scmp.eq.s32.totalorder %s33, 1
      %p531 = por %p529, %p530
      %p533 = scmp.ne.s32.totalorder %s518, %s532
      %p534 = scmp.eq.s32.totalorder %s33, 0
      %p535 = por %p533, %p534
      %p536 = scmp.le.s32.totalorder 1, %s27
      %p537 = scmp.lt.s32.totalorder %s27, 3
      %p538 = pnand %p536, %p537
      %p539 = pneg %p538
      // Predicated region
      $region9: #{bert_for_relations_forward.1} parent=5 // pred_check
        _
      $region10: #{bert_for_relations_forward.1} parent=5 // pred_check_branch
        %541 = sbr.rel (%p538) target = $region12
      $region11: #{bert_for_relations_forward.1} parent=5 // pred_region
        %s542 = ssub.s32 %s27, 1
        // Predicated region
        $region13: #{bert_for_relations_forward.1} parent=11 // pred_check
          %p543 = pneg %p48
        $region14: #{bert_for_relations_forward.1} parent=11 // pred_check_branch
          %545 = sbr.rel (%p543) target = $region16
        $region15: #{bert_for_relations_forward.1} parent=11 // pred_region
          _
        $region16: #{bert_for_relations_forward.1} parent=11 // pred_fallthru
          _
        // Predicated region
        $region17: #{bert_for_relations_forward.1} parent=11 // pred_check
          %p546 = pneg %p69
        $region18: #{bert_for_relations_forward.1} parent=11 // pred_check_branch
          %548 = sbr.rel (%p546) target = $region20
        $region19: #{bert_for_relations_forward.1} parent=11 // pred_region
          _
        $region20: #{bert_for_relations_forward.1} parent=11 // pred_fallthru
          _
        // Predicated region
        $region21: #{bert_for_relations_forward.1} parent=11 // pred_check
          %p549 = pneg %p90
        $region22: #{bert_for_relations_forward.1} parent=11 // pred_check_branch
          %551 = sbr.rel (%p549) target = $region24
        $region23: #{bert_for_relations_forward.1} parent=11 // pred_region
          _
        $region24: #{bert_for_relations_forward.1} parent=11 // pred_fallthru
          _
        // Predicated region
        $region25: #{bert_for_relations_forward.1} parent=11 // pred_check
          %p552 = pneg %p111
        $region26: #{bert_for_relations_forward.1} parent=11 // pred_check_branch
          %554 = sbr.rel (%p552) target = $region28
        $region27: #{bert_for_relations_forward.1} parent=11 // pred_region
          _
        $region28: #{bert_for_relations_forward.1} parent=11 // pred_fallthru
          _
        // Predicated region
        $region29: #{bert_for_relations_forward.1} parent=11 // pred_check
          %p555 = pneg %p444
        $region30: #{bert_for_relations_forward.1} parent=11 // pred_check_branch
          %557 = sbr.rel (%p555) target = $region32
        $region31: #{bert_for_relations_forward.1} parent=11 // pred_region
          _
        $region32: #{bert_for_relations_forward.1} parent=11 // pred_fallthru
          _
        // Predicated region
        $region33: #{bert_for_relations_forward.1} parent=11 // pred_check
          %p558 = pneg %p465
        $region34: #{bert_for_relations_forward.1} parent=11 // pred_check_branch
          %560 = sbr.rel (%p558) target = $region36
        $region35: #{bert_for_relations_forward.1} parent=11 // pred_region
          _
        $region36: #{bert_for_relations_forward.1} parent=11 // pred_fallthru
          _
        // Predicated region
        $region37: #{bert_for_relations_forward.1} parent=11 // pred_check
          %p561 = pneg %p486
        $region38: #{bert_for_relations_forward.1} parent=11 // pred_check_branch
          %563 = sbr.rel (%p561) target = $region40
        $region39: #{bert_for_relations_forward.1} parent=11 // pred_region
          _
        $region40: #{bert_for_relations_forward.1} parent=11 // pred_fallthru
          _
        // Predicated region
        $region41: #{bert_for_relations_forward.1} parent=11 // pred_check
          %p564 = pneg %p507
        $region42: #{bert_for_relations_forward.1} parent=11 // pred_check_branch
          %566 = sbr.rel (%p564) target = $region44
        $region43: #{bert_for_relations_forward.1} parent=11 // pred_region
          _
        $region44: #{bert_for_relations_forward.1} parent=11 // pred_fallthru
          _
      $region12: #{bert_for_relations_forward.1} parent=5 // pred_fallthru
        _
      %p567 = scmp.lt.s32.totalorder %s27, 2
      // Predicated region
      $region45: #{bert_for_relations_forward.1} parent=5 // pred_check
        %p568 = pneg %p567
      $region46: #{bert_for_relations_forward.1} parent=5 // pred_check_branch
        %570 = sbr.rel (%p568) target = $region48
      $region47: #{bert_for_relations_forward.1} parent=5 // pred_region
        // Predicated region
        $region49: #{bert_for_relations_forward.1} parent=47 // pred_check
          %p571 = pneg %p131
        $region50: #{bert_for_relations_forward.1} parent=47 // pred_check_branch
          %573 = sbr.rel (%p571) target = $region52
        $region51: #{bert_for_relations_forward.1} parent=47 // pred_region
          %p574 = scmp.lt.s32.totalorder %s27, 1
          %s575 = scalar_select %p574, %s27, 1
          %s576 = smul.addr %s575, 48
          %s577 = smul.addr %s576, 4
          %s578 = scalar_lea.vmem %s4, %s577
        $region52: #{bert_for_relations_forward.1} parent=47 // pred_fallthru
          _
        // Predicated region
        $region53: #{bert_for_relations_forward.1} parent=47 // pred_check
          %p579 = pneg %p157
        $region54: #{bert_for_relations_forward.1} parent=47 // pred_check_branch
          %581 = sbr.rel (%p579) target = $region56
        $region55: #{bert_for_relations_forward.1} parent=47 // pred_region
          %p582 = scmp.lt.s32.totalorder %s27, 1
          %s583 = scalar_select %p582, %s27, 1
          %s584 = smul.addr %s583, 3
          %s585 = scalar_lea.vmem %s5, %s584
        $region56: #{bert_for_relations_forward.1} parent=47 // pred_fallthru
          _
        // Predicated region
        $region57: #{bert_for_relations_forward.1} parent=47 // pred_check
          %p586 = pneg %p183
        $region58: #{bert_for_relations_forward.1} parent=47 // pred_check_branch
          %588 = sbr.rel (%p586) target = $region60
        $region59: #{bert_for_relations_forward.1} parent=47 // pred_region
          %p589 = scmp.lt.s32.totalorder %s27, 1
          %s590 = scalar_select %p589, %s27, 1
          %s591 = smul.addr %s590, 16
          %s592 = smul.addr %s591, 4
          %s593 = scalar_lea.vmem %s6, %s592
        $region60: #{bert_for_relations_forward.1} parent=47 // pred_fallthru
          _
        // Predicated region
        $region61: #{bert_for_relations_forward.1} parent=47 // pred_check
          %p594 = pneg %p209
        $region62: #{bert_for_relations_forward.1} parent=47 // pred_check_branch
          %596 = sbr.rel (%p594) target = $region64
        $region63: #{bert_for_relations_forward.1} parent=47 // pred_region
          %p597 = scmp.lt.s32.totalorder %s27, 1
          %s598 = scalar_select %p597, %s27, 1
          %s599 = scalar_lea.vmem %s7, %s598
        $region64: #{bert_for_relations_forward.1} parent=47 // pred_fallthru
          _
        // Predicated region
        $region65: #{bert_for_relations_forward.1} parent=47 // pred_check
          %p600 = pneg %p235
        $region66: #{bert_for_relations_forward.1} parent=47 // pred_check_branch
          %602 = sbr.rel (%p600) target = $region68
        $region67: #{bert_for_relations_forward.1} parent=47 // pred_region
          %p603 = scmp.lt.s32.totalorder %s27, 1
          %s604 = scalar_select %p603, %s27, 1
          %s605 = scalar_lea.vmem %s8, %s604
        $region68: #{bert_for_relations_forward.1} parent=47 // pred_fallthru
          _
        // Predicated region
        $region69: #{bert_for_relations_forward.1} parent=47 // pred_check
          %p606 = pneg %p261
        $region70: #{bert_for_relations_forward.1} parent=47 // pred_check_branch
          %608 = sbr.rel (%p606) target = $region72
        $region71: #{bert_for_relations_forward.1} parent=47 // pred_region
          %p609 = scmp.lt.s32.totalorder %s27, 1
          %s610 = scalar_select %p609, %s27, 1
          %s611 = scalar_lea.vmem %s9, %s610
        $region72: #{bert_for_relations_forward.1} parent=47 // pred_fallthru
          _
        // Predicated region
        $region73: #{bert_for_relations_forward.1} parent=47 // pred_check
          %p612 = pneg %p287
        $region74: #{bert_for_relations_forward.1} parent=47 // pred_check_branch
          %614 = sbr.rel (%p612) target = $region76
        $region75: #{bert_for_relations_forward.1} parent=47 // pred_region
          %p615 = scmp.lt.s32.totalorder %s27, 1
          %s616 = scalar_select %p615, %s27, 1
          %s617 = smul.addr %s616, 32
          %s618 = smul.addr %s617, 4
          %s619 = scalar_lea.vmem %s10, %s618
        $region76: #{bert_for_relations_forward.1} parent=47 // pred_fallthru
          _
        // Predicated region
        $region77: #{bert_for_relations_forward.1} parent=47 // pred_check
          %p620 = pneg %p313
        $region78: #{bert_for_relations_forward.1} parent=47 // pred_check_branch
          %622 = sbr.rel (%p620) target = $region80
        $region79: #{bert_for_relations_forward.1} parent=47 // pred_region
          %p623 = scmp.lt.s32.totalorder %s27, 1
          %s624 = scalar_select %p623, %s27, 1
          %s625 = smul.addr %s624, 2
          %s626 = scalar_lea.vmem %s11, %s625
        $region80: #{bert_for_relations_forward.1} parent=47 // pred_fallthru
          _
        // Predicated region
        $region81: #{bert_for_relations_forward.1} parent=47 // pred_check
          %p627 = pneg %p339
        $region82: #{bert_for_relations_forward.1} parent=47 // pred_check_branch
          %629 = sbr.rel (%p627) target = $region84
        $region83: #{bert_for_relations_forward.1} parent=47 // pred_region
          %p630 = scmp.lt.s32.totalorder %s27, 1
          %s631 = scalar_select %p630, %s27, 1
          %s632 = smul.addr %s631, 32
          %s633 = smul.addr %s632, 4
          %s634 = scalar_lea.vmem %s12, %s633
        $region84: #{bert_for_relations_forward.1} parent=47 // pred_fallthru
          _
        // Predicated region
        $region85: #{bert_for_relations_forward.1} parent=47 // pred_check
          %p635 = pneg %p365
        $region86: #{bert_for_relations_forward.1} parent=47 // pred_check_branch
          %637 = sbr.rel (%p635) target = $region88
        $region87: #{bert_for_relations_forward.1} parent=47 // pred_region
          %p638 = scmp.lt.s32.totalorder %s27, 1
          %s639 = scalar_select %p638, %s27, 1
          %s640 = scalar_lea.vmem %s13, %s639
        $region88: #{bert_for_relations_forward.1} parent=47 // pred_fallthru
          _
        // Predicated region
        $region89: #{bert_for_relations_forward.1} parent=47 // pred_check
          %p641 = pneg %p391
        $region90: #{bert_for_relations_forward.1} parent=47 // pred_check_branch
          %643 = sbr.rel (%p641) target = $region92
        $region91: #{bert_for_relations_forward.1} parent=47 // pred_region
          %p644 = scmp.lt.s32.totalorder %s27, 1
          %s645 = scalar_select %p644, %s27, 1
          %s646 = scalar_lea.vmem %s14, %s645
        $region92: #{bert_for_relations_forward.1} parent=47 // pred_fallthru
          _
        // Predicated region
        $region93: #{bert_for_relations_forward.1} parent=47 // pred_check
          %p647 = pneg %p417
        $region94: #{bert_for_relations_forward.1} parent=47 // pred_check_branch
          %649 = sbr.rel (%p647) target = $region96
        $region95: #{bert_for_relations_forward.1} parent=47 // pred_region
          %p650 = scmp.lt.s32.totalorder %s27, 1
          %s651 = scalar_select %p650, %s27, 1
          %s652 = scalar_lea.vmem %s15, %s651
        $region96: #{bert_for_relations_forward.1} parent=47 // pred_fallthru
          _
      $region48: #{bert_for_relations_forward.1} parent=5 // pred_fallthru
        _
      %p653 = scmp.le.s32.totalorder 1, %s27
      %p654 = scmp.lt.s32.totalorder %s27, 3
      %p655 = pnand %p653, %p654
      %p656 = pneg %p655
      // Predicated region
      $region97: #{bert_for_relations_forward.1} parent=5 // pred_check
        _
      $region98: #{bert_for_relations_forward.1} parent=5 // pred_check_branch
        %658 = sbr.rel (%p655) target = $region100
      $region99: #{bert_for_relations_forward.1} parent=5 // pred_region
        %s659 = ssub.s32 %s27, 1
        %p660 = pneg %p48
        %p661 = pneg %p45
        %p662 = pneg %p69
        %p663 = pneg %p66
        %p664 = pneg %p90
        %p665 = pneg %p87
        %p666 = pneg %p111
        %p667 = pneg %p108
        %p668 = scmp.lt.s32.totalorder %s32, 1
        %s669 = scalar_select %p668, %s32, 1
        %s670 = smul.addr %s669, 48
        %s671 = smul.addr %s670, 4
        %s672 = scalar_lea.vmem %s4, %s671
        %p673 = pneg %p137
        %p674 = pneg %p134
        %p675 = scmp.lt.s32.totalorder %s32, 1
        %s676 = scalar_select %p675, %s32, 1
        %s677 = smul.addr %s676, 3
        %s678 = scalar_lea.vmem %s5, %s677
        %p679 = pneg %p163
        %p680 = pneg %p160
        %p681 = scmp.lt.s32.totalorder %s32, 1
        %s682 = scalar_select %p681, %s32, 1
        %s683 = smul.addr %s682, 16
        %s684 = smul.addr %s683, 4
        %s685 = scalar_lea.vmem %s6, %s684
        %p686 = pneg %p189
        %p687 = pneg %p186
        %p688 = scmp.lt.s32.totalorder %s32, 1
        %s689 = scalar_select %p688, %s32, 1
        %s690 = scalar_lea.vmem %s7, %s689
        %p691 = pneg %p215
        %p692 = pneg %p212
        %p693 = scmp.lt.s32.totalorder %s32, 1
        %s694 = scalar_select %p693, %s32, 1
        %s695 = scalar_lea.vmem %s8, %s694
        %p696 = pneg %p241
        %p697 = pneg %p238
        %p698 = scmp.lt.s32.totalorder %s32, 1
        %s699 = scalar_select %p698, %s32, 1
        %s700 = scalar_lea.vmem %s9, %s699
        %p701 = pneg %p267
        %p702 = pneg %p264
        %p703 = scmp.lt.s32.totalorder %s32, 1
        %s704 = scalar_select %p703, %s32, 1
        %s705 = smul.addr %s704, 32
        %s706 = smul.addr %s705, 4
        %s707 = scalar_lea.vmem %s10, %s706
        %p708 = pneg %p293
        %p709 = pneg %p290
        %p710 = scmp.lt.s32.totalorder %s32, 1
        %s711 = scalar_select %p710, %s32, 1
        %s712 = smul.addr %s711, 2
        %s713 = scalar_lea.vmem %s11, %s712
        %p714 = pneg %p319
        %p715 = pneg %p316
        %p716 = scmp.lt.s32.totalorder %s32, 1
        %s717 = scalar_select %p716, %s32, 1
        %s718 = smul.addr %s717, 32
        %s719 = smul.addr %s718, 4
        %s720 = scalar_lea.vmem %s12, %s719
        %p721 = pneg %p345
        %p722 = pneg %p342
        %p723 = scmp.lt.s32.totalorder %s32, 1
        %s724 = scalar_select %p723, %s32, 1
        %s725 = scalar_lea.vmem %s13, %s724
        %p726 = pneg %p371
        %p727 = pneg %p368
        %p728 = scmp.lt.s32.totalorder %s32, 1
        %s729 = scalar_select %p728, %s32, 1
        %s730 = scalar_lea.vmem %s14, %s729
        %p731 = pneg %p397
        %p732 = pneg %p394
        %p733 = scmp.lt.s32.totalorder %s32, 1
        %s734 = scalar_select %p733, %s32, 1
        %s735 = scalar_lea.vmem %s15, %s734
        %p736 = pneg %p423
        %p737 = pneg %p420
        %p738 = pneg %p444
        %p739 = pneg %p441
        %p740 = pneg %p465
        %p741 = pneg %p462
        %p742 = pneg %p486
        %p743 = pneg %p483
        %p744 = pneg %p507
        %p745 = pneg %p504
        %p746 = pneg %p528
        %p747 = pneg %p525
        %p748 = scmp.lt.s32.totalorder %s32, 1
        %s749 = scalar_select %p748, %s32, 1
        %s750 = smul.addr %s749, 48
        %s751 = smul.addr %s750, 4
        %s752 = scalar_lea.vmem %s4, %s751
        %p753 = scmp.lt.s32.totalorder %s32, 1
        %s754 = scalar_select %p753, %s32, 1
        %s755 = smul.addr %s754, 3
        %s756 = scalar_lea.vmem %s5, %s755
        %p757 = scmp.lt.s32.totalorder %s32, 1
        %s758 = scalar_select %p757, %s32, 1
        %s759 = smul.addr %s758, 16
        %s760 = smul.addr %s759, 4
        %s761 = scalar_lea.vmem %s6, %s760
        %p762 = scmp.lt.s32.totalorder %s32, 1
        %s763 = scalar_select %p762, %s32, 1
        %s764 = scalar_lea.vmem %s7, %s763
        %p765 = scmp.lt.s32.totalorder %s32, 1
        %s766 = scalar_select %p765, %s32, 1
        %s767 = scalar_lea.vmem %s8, %s766
        %p768 = scmp.lt.s32.totalorder %s32, 1
        %s769 = scalar_select %p768, %s32, 1
        %s770 = scalar_lea.vmem %s9, %s769
        %p771 = scmp.lt.s32.totalorder %s32, 1
        %s772 = scalar_select %p771, %s32, 1
        %s773 = smul.addr %s772, 32
        %s774 = smul.addr %s773, 4
        %s775 = scalar_lea.vmem %s10, %s774
        %p776 = scmp.lt.s32.totalorder %s32, 1
        %s777 = scalar_select %p776, %s32, 1
        %s778 = smul.addr %s777, 2
        %s779 = scalar_lea.vmem %s11, %s778
        %p780 = scmp.lt.s32.totalorder %s32, 1
        %s781 = scalar_select %p780, %s32, 1
        %s782 = smul.addr %s781, 32
        %s783 = smul.addr %s782, 4
        %s784 = scalar_lea.vmem %s12, %s783
        %p785 = scmp.lt.s32.totalorder %s32, 1
        %s786 = scalar_select %p785, %s32, 1
        %s787 = scalar_lea.vmem %s13, %s786
        %p788 = scmp.lt.s32.totalorder %s32, 1
        %s789 = scalar_select %p788, %s32, 1
        %s790 = scalar_lea.vmem %s14, %s789
        %p791 = scmp.lt.s32.totalorder %s32, 1
        %s792 = scalar_select %p791, %s32, 1
        %s793 = scalar_lea.vmem %s15, %s792
        %p795 = scmp.eq.s32.totalorder %s32, 0
        // Predicated region
        $region101: #{bert_for_relations_forward.1} parent=99 // pred_check
          %p796 = pneg %p795
        $region102: #{bert_for_relations_forward.1} parent=99 // pred_check_branch
          %798 = sbr.rel (%p796) target = $region104
        $region103: #{bert_for_relations_forward.1} parent=99 // pred_region
          %v799 = vld [vmem:[%s0] sm:$0xff]
          %v800 = vld [vmem:[%s0 + $0x8] sm:$0xff]
          %v801 = vld [vmem:[%s2] sm:$0x1]
          %v802 = vld [vmem:[%s3] sm:$0x1]
          %803 = vadd.xlane.f32.xlu0 %v799
          %v804 = vpop.xlane.xlu0 %803
          %805 = vadd.xlane.f32.xlu0 %v800
          %v806 = vpop.xlane.xlu0 %805
          %v807 = vrcp.pop 128.0
          %v808 = vmul.f32 128.0, %v807
          %v809 = vsub.f32 1.0, %v808
          %v810 = vmul.f32 %v807, %v809
          %v811 = vadd.f32 %v807, %v810
          %vm812 = vweird.f32 %v807
          %v813 = vsel %vm812, %v807, %v811
          %v814 = vmul.f32 %v804, %v813
          %v815 = vmul.f32 %v806, %v813
          %v816 = vmul.f32 %v799, %v799
          %v817 = vmul.f32 %v800, %v800
          %818 = vadd.xlane.f32.xlu0 %v816
          %v819 = vpop.xlane.xlu0 %818
          %820 = vadd.xlane.f32.xlu0 %v817
          %v821 = vpop.xlane.xlu0 %820
          %v822 = vmul.f32 %v819, %v813
          %v823 = vmul.f32 %v821, %v813
          %v824 = vmul.f32 %v814, %v814
          %v825 = vmul.f32 %v815, %v815
          %v826 = vsub.f32 %v822, %v824
          %v827 = vsub.f32 %v823, %v825
          %v828 = vsub.f32 %v799, %v814
          %v829 = vsub.f32 %v800, %v815
          %v830 = vadd.f32 %v826, 1e-12
          %v831 = vadd.f32 %v827, 1e-12
          %v832 = vrsqrt.pop %v830
          %v833 = vmul.f32 %v832, %v830
          %v834 = vmul.f32 %v833, %v832
          %v835 = vmul.f32 0.5, %v834
          %v836 = vsub.f32 1.5, %v835
          %v837 = vmul.f32 %v832, %v836
          %vm838 = vweird.f32 %v830
          %vm839 = vweird.f32 %v832
          %vm840 = vmor %vm838, %vm839
          %v841 = vsel %vm840, %v832, %v837
          %v842 = vrsqrt.pop %v831
          %v843 = vmul.f32 %v842, %v831
          %v844 = vmul.f32 %v843, %v842
          %v845 = vmul.f32 0.5, %v844
          %v846 = vsub.f32 1.5, %v845
          %v847 = vmul.f32 %v842, %v846
          %vm848 = vweird.f32 %v831
          %vm849 = vweird.f32 %v842
          %vm850 = vmor %vm848, %vm849
          %v851 = vsel %vm850, %v842, %v847
          %v852 = vmul.f32 %v828, %v841
          %v853 = vmul.f32 %v829, %v851
          %v855 = vperm.slane %v801, 0
          %v857 = vmul.f32 %v852, %v855
          %v858 = vmul.f32 %v853, %v855
          %v860 = vperm.slane %v802, 0
          %v862 = vadd.f32 %v857, %v860
          %v863 = vadd.f32 %v858, %v860
          %864 = vst [vmem:[#allocation2] sm:$0xff] %v862
          %865 = vst [vmem:[#allocation2 + $0x8] sm:$0xff] %v863
        $region104: #{bert_for_relations_forward.1} parent=99 // pred_fallthru
          _
        %v866 = vld [vmem:[#allocation2] sm:$0xff]
        %v867 = vld [vmem:[#allocation2 + $0x8] sm:$0xff]
        %v868 = vld [vmem:[%s1] sm:$0x1]
        %v869 = vld [vmem:[%s1 + $0x1] sm:$0x1]
        %v870 = vpack.c.bf16 %v867, %v866
        %v871 = vld [vmem:[%s752] sm:$0xff]
        %v872 = vld [vmem:[%s752 + $0x8] sm:$0xf]
        %v873 = vld [vmem:[%s752 + $0xc] sm:$0xff]
        %v874 = vld [vmem:[%s752 + $0x14] sm:$0xf]
        %v875 = vld [vmem:[%s752 + $0x18] sm:$0xff]
        %v876 = vld [vmem:[%s752 + $0x20] sm:$0xf]
        %v877 = vld [vmem:[%s752 + $0x24] sm:$0xff]
        %v878 = vld [vmem:[%s752 + $0x2c] sm:$0xf]
        %v879 = vld [vmem:[%s752 + $0x30] sm:$0xff]
        %v880 = vld [vmem:[%s752 + $0x38] sm:$0xf]
        %v881 = vld [vmem:[%s752 + $0x3c] sm:$0xff]
        %v882 = vld [vmem:[%s752 + $0x44] sm:$0xf]
        %v883 = vld [vmem:[%s752 + $0x48] sm:$0xff]
        %v884 = vld [vmem:[%s752 + $0x50] sm:$0xf]
        %v885 = vld [vmem:[%s752 + $0x54] sm:$0xff]
        %v886 = vld [vmem:[%s752 + $0x5c] sm:$0xf]
        %v887 = vld [vmem:[%s752 + $0x60] sm:$0xff]
        %v888 = vld [vmem:[%s752 + $0x68] sm:$0xf]
        %v889 = vld [vmem:[%s752 + $0x6c] sm:$0xff]
        %v890 = vld [vmem:[%s752 + $0x74] sm:$0xf]
        %v891 = vld [vmem:[%s752 + $0x78] sm:$0xff]
        %v892 = vld [vmem:[%s752 + $0x80] sm:$0xf]
        %v893 = vld [vmem:[%s752 + $0x84] sm:$0xff]
        %v894 = vld [vmem:[%s752 + $0x8c] sm:$0xf]
        %v895 = vld [vmem:[%s752 + $0x90] sm:$0xff]
        %v896 = vld [vmem:[%s752 + $0x98] sm:$0xf]
        %v897 = vld [vmem:[%s752 + $0x9c] sm:$0xff]
        %v898 = vld [vmem:[%s752 + $0xa4] sm:$0xf]
        %v899 = vld [vmem:[%s752 + $0xa8] sm:$0xff]
        %v900 = vld [vmem:[%s752 + $0xb0] sm:$0xf]
        %v901 = vld [vmem:[%s752 + $0xb4] sm:$0xff]
        %v902 = vld [vmem:[%s752 + $0xbc] sm:$0xf]
        %v903 = vld [vmem:[%s756] sm:$0x7]
        %v905 = vperm.slane %v903, 0
        %v906 = vperm.slane %v903, 1
        %v907 = vperm.slane %v903, 2
        %v943 = vunpack.c.l.b16 %v871
        %v944 = vunpack.c.h.b16 %v871
        %v945 = vunpack.c.l.b16 %v872
        %v946 = vunpack.c.l.b16 %v873
        %v947 = vunpack.c.h.b16 %v873
        %v948 = vunpack.c.l.b16 %v874
        %v949 = vunpack.c.l.b16 %v875
        %v950 = vunpack.c.h.b16 %v875
        %v951 = vunpack.c.l.b16 %v876
        %v952 = vunpack.c.l.b16 %v877
        %v953 = vunpack.c.h.b16 %v877
        %v954 = vunpack.c.l.b16 %v878
        %v955 = vunpack.c.l.b16 %v879
        %v956 = vunpack.c.h.b16 %v879
        %v957 = vunpack.c.l.b16 %v880
        %v958 = vunpack.c.l.b16 %v881
        %v959 = vunpack.c.h.b16 %v881
        %v960 = vunpack.c.l.b16 %v882
        %v961 = vunpack.c.l.b16 %v883
        %v962 = vunpack.c.h.b16 %v883
        %v963 = vunpack.c.l.b16 %v884
        %v964 = vunpack.c.l.b16 %v885
        %v965 = vunpack.c.h.b16 %v885
        %v966 = vunpack.c.l.b16 %v886
        %v967 = vunpack.c.l.b16 %v887
        %v968 = vunpack.c.h.b16 %v887
        %v969 = vunpack.c.l.b16 %v888
        %v970 = vunpack.c.l.b16 %v889
        %v971 = vunpack.c.h.b16 %v889
        %v972 = vunpack.c.l.b16 %v890
        %v973 = vunpack.c.l.b16 %v891
        %v974 = vunpack.c.h.b16 %v891
        %v975 = vunpack.c.l.b16 %v892
        %v976 = vunpack.c.l.b16 %v893
        %v977 = vunpack.c.h.b16 %v893
        %v978 = vunpack.c.l.b16 %v894
        %v979 = vunpack.c.l.b16 %v895
        %v980 = vunpack.c.h.b16 %v895
        %v981 = vunpack.c.l.b16 %v896
        %v982 = vunpack.c.l.b16 %v897
        %v983 = vunpack.c.h.b16 %v897
        %v984 = vunpack.c.l.b16 %v898
        %v985 = vunpack.c.l.b16 %v899
        %v986 = vunpack.c.h.b16 %v899
        %v987 = vunpack.c.l.b16 %v900
        %v988 = vunpack.c.l.b16 %v901
        %v989 = vunpack.c.h.b16 %v901
        %v990 = vunpack.c.l.b16 %v902
        %v991 = vpack.c.b16 %v946, %v943
        %v992 = vpack.c.b16 %v947, %v944
        %v993 = vpack.c.b16 %v948, %v945
        %v994 = vpack.c.b16 %v952, %v949
        %v995 = vpack.c.b16 %v953, %v950
        %v996 = vpack.c.b16 %v954, %v951
        %v997 = vpack.c.b16 %v958, %v955
        %v998 = vpack.c.b16 %v959, %v956
        %v999 = vpack.c.b16 %v960, %v957
        %v1000 = vpack.c.b16 %v964, %v961
        %v1001 = vpack.c.b16 %v965, %v962
        %v1002 = vpack.c.b16 %v966, %v963
        %v1003 = vpack.c.b16 %v970, %v967
        %v1004 = vpack.c.b16 %v971, %v968
        %v1005 = vpack.c.b16 %v972, %v969
        %v1006 = vpack.c.b16 %v976, %v973
        %v1007 = vpack.c.b16 %v977, %v974
        %v1008 = vpack.c.b16 %v978, %v975
        %v1009 = vpack.c.b16 %v982, %v979
        %v1010 = vpack.c.b16 %v983, %v980
        %v1011 = vpack.c.b16 %v984, %v981
        %v1012 = vpack.c.b16 %v988, %v985
        %v1013 = vpack.c.b16 %v989, %v986
        %v1014 = vpack.c.b16 %v990, %v987
        %1039 = vmatpush.bf16.msra.mxu0 %v1012
        %1040 = vmatpush.bf16.msra.mxu0 %v1009
        %1041 = vmatpush.bf16.msra.mxu0 %v1006
        %1042 = vmatpush.bf16.msra.mxu0 %v1003
        %1043 = vmatpush.bf16.msra.mxu0 %v1000
        %1044 = vmatpush.bf16.msra.mxu0 %v997
        %1045 = vmatpush.bf16.msra.mxu0 %v994
        %1046 = vmatpush.bf16.msra.mxu0 %v991
        %1047 = vmatmul.bf16.gmra.mxu0 %v870
        %v1048 = vpop.f32.mrf.mxu0
        %v1049 = vadd.f32 %v905, %v1048
        %v1050 = vpop.f32.mrf.mxu0
        %v1051 = vadd.f32 %v905, %v1050
        %1052 = vdwg.mxu0
        %1053 = vmatpush.bf16.msra.mxu0 %v1013
        %1054 = vmatpush.bf16.msra.mxu0 %v1010
        %1055 = vmatpush.bf16.msra.mxu0 %v1007
        %1056 = vmatpush.bf16.msra.mxu0 %v1004
        %1057 = vmatpush.bf16.msra.mxu0 %v1001
        %1058 = vmatpush.bf16.msra.mxu0 %v998
        %1059 = vmatpush.bf16.msra.mxu0 %v995
        %1060 = vmatpush.bf16.msra.mxu0 %v992
        %1061 = vmatmul.bf16.gmra.mxu0 %v870
        %v1062 = vpop.f32.mrf.mxu0
        %v1063 = vadd.f32 %v906, %v1062
        %v1064 = vpop.f32.mrf.mxu0
        %v1065 = vadd.f32 %v906, %v1064
        %1066 = vdwg.mxu0
        %1067 = vmatpush.bf16.msra.mxu0 %v1014
        %1068 = vmatpush.bf16.msra.mxu0 %v1011
        %1069 = vmatpush.bf16.msra.mxu0 %v1008
        %1070 = vmatpush.bf16.msra.mxu0 %v1005
        %1071 = vmatpush.bf16.msra.mxu0 %v1002
        %1072 = vmatpush.bf16.msra.mxu0 %v999
        %1073 = vmatpush.bf16.msra.mxu0 %v996
        %1074 = vmatpush.bf16.msra.mxu0 %v993
        %1075 = vmatmul.bf16.gmra.mxu0 %v870
        %v1076 = vpop.f32.mrf.mxu0
        %v1077 = vadd.f32 %v907, %v1076
        %v1078 = vpop.f32.mrf.mxu0
        %v1079 = vadd.f32 %v907, %v1078
        %1080 = vdwg.mxu0
        %v1081 = vpack.c.bf16 %v1049, %v1049
        %v1082 = vpack.c.bf16 %v1051, %v1051
        %v1083 = vpack.c.bf16 %v1063, %v1063
        %v1084 = vpack.c.bf16 %v1065, %v1065
        %v1085 = vpack.c.bf16 %v1077, %v1077
        %v1086 = vpack.c.bf16 %v1079, %v1079
        %v1089 = vperm.slane %v868, 0
        %v1090 = vperm.slane %v869, 0
        %vm1093 = vcmask 261120
        %v1095 = vsel %vm1093, %v1081, 0
        %v1098 = vsel %vm1093, %v1083, 0
        %1100 = vmatpush.bf16.xpose.msra.mxu0 0
        %1101 = vmatpush.bf16.xpose.msra.mxu0 0
        %1102 = vmatpush.bf16.xpose.msra.mxu0 0
        %1103 = vmatpush.bf16.xpose.msra.mxu0 0
        %1104 = vmatpush.bf16.xpose.msra.mxu0 0
        %1105 = vmatpush.bf16.xpose.msra.mxu0 0
        %1106 = vmatpush.bf16.xpose.msra.mxu0 0
        %1107 = vmatpush.bf16.xpose.msra.mxu0 %v1098
        %1108 = vmatmul.bf16.gmra.mxu0 %v1095
        %v1109 = vpop.f32.mrf.mxu0
        %v1110 = vadd.f32 %v1089, %v1109
        %v1111 = vpop.f32.mrf.mxu0
        %1112 = vdwg.mxu0
        %v1114 = vsel %vm1093, %v1082, 0
        %v1117 = vsel %vm1093, %v1084, 0
        %1119 = vmatpush.bf16.xpose.msra.mxu0 0
        %1120 = vmatpush.bf16.xpose.msra.mxu0 0
        %1121 = vmatpush.bf16.xpose.msra.mxu0 0
        %1122 = vmatpush.bf16.xpose.msra.mxu0 0
        %1123 = vmatpush.bf16.xpose.msra.mxu0 0
        %1124 = vmatpush.bf16.xpose.msra.mxu0 0
        %1125 = vmatpush.bf16.xpose.msra.mxu0 0
        %1126 = vmatpush.bf16.xpose.msra.mxu0 %v1117
        %1127 = vmatmul.bf16.gmra.mxu0 %v1114
        %v1128 = vpop.f32.mrf.mxu0
        %v1129 = vadd.f32 %v1090, %v1128
        %v1130 = vpop.f32.mrf.mxu0
        %1131 = vdwg.mxu0
        %vm1132 = vcmask 64512
        %v1133 = vsel %vm1132, %v1110, -inf
        %1134 = vmax.xlane.f32.xlu0 %v1133
        %v1135 = vpop.xlane.xlu0 %1134
        %v1136 = vsel %vm1132, %v1129, -inf
        %1137 = vmax.xlane.f32.xlu0 %v1136
        %v1138 = vpop.xlane.xlu0 %1137
        %v1139 = vsub.f32 %v1110, %v1135
        %v1140 = vsub.f32 %v1129, %v1138
        %v1141 = vmul.f32 %v1139, 1.442695
        %v1142 = vpow.pop %v1141
        %v1143 = vmul.f32 %v1140, 1.442695
        %v1144 = vpow.pop %v1143
        %v1145 = vsel %vm1132, %v1142, 0.0
        %1146 = vadd.xlane.f32.xlu0 %v1145
        %v1147 = vpop.xlane.xlu0 %1146
        %v1148 = vsel %vm1132, %v1144, 0.0
        %1149 = vadd.xlane.f32.xlu0 %v1148
        %v1150 = vpop.xlane.xlu0 %1149
        %v1151 = vrcp.pop %v1147
        %v1152 = vrcp.pop %v1150
        %v1153 = vpack.c.bf16 %v1142, %v1142
        %v1154 = vpack.c.bf16 %v1144, %v1144
        %v1156 = vsel %vm1132, %v1153, 0
        %vm1158 = vcmask 1043456
        %v1160 = vsel %vm1158, %v1085, 0
        %1162 = vmatpush.bf16.msra.mxu0 0
        %1163 = vmatpush.bf16.msra.mxu0 0
        %1164 = vmatpush.bf16.msra.mxu0 0
        %1165 = vmatpush.bf16.msra.mxu0 0
        %1166 = vmatpush.bf16.msra.mxu0 0
        %1167 = vmatpush.bf16.msra.mxu0 0
        %1168 = vmatpush.bf16.msra.mxu0 0
        %1169 = vmatpush.bf16.msra.mxu0 %v1160
        %1170 = vmatmul.bf16.gmra.mxu0 %v1156
        %v1171 = vpop.f32.mrf.mxu0
        %v1172 = vadd.f32 0.0, %v1171
        %v1173 = vpop.f32.mrf.mxu0
        %1174 = vdwg.mxu0
        %v1176 = vsel %vm1132, %v1154, 0
        %v1179 = vsel %vm1158, %v1086, 0
        %1181 = vmatpush.bf16.msra.mxu0 0
        %1182 = vmatpush.bf16.msra.mxu0 0
        %1183 = vmatpush.bf16.msra.mxu0 0
        %1184 = vmatpush.bf16.msra.mxu0 0
        %1185 = vmatpush.bf16.msra.mxu0 0
        %1186 = vmatpush.bf16.msra.mxu0 0
        %1187 = vmatpush.bf16.msra.mxu0 0
        %1188 = vmatpush.bf16.msra.mxu0 %v1179
        %1189 = vmatmul.bf16.gmra.mxu0 %v1176
        %v1190 = vpop.f32.mrf.mxu0
        %v1191 = vadd.f32 0.0, %v1190
        %v1192 = vpop.f32.mrf.mxu0
        %1193 = vdwg.mxu0
        %v1194 = vmul.f32 %v1172, %v1151
        %v1195 = vmul.f32 %v1191, %v1152
        %v1196 = vpack.c.bf16 %v1194, %v1194
        %v1197 = vpack.c.bf16 %v1195, %v1195
        %vm1198 = vcmask 257024
        %1199 = vst.msk [vmem:[#allocation3] sm:$0xf] %vm1198, %v1196
        %1200 = vst.msk [vmem:[#allocation3 + $0x4] sm:$0xf] %vm1198, %v1197
        %v1202 = vunpack.c.l.b16 %v1081
        %v1203 = vpack.c.b16 %v1202, %v1202
        %1204 = vrot.lane.b32.xlu0 %v1203, 96
        %v1205 = vpop.permute.xlu0 %1204
        %v1207 = vunpack.c.l.b16 %v1083
        %v1208 = vpack.c.b16 %v1207, %v1207
        %1209 = vrot.lane.b32.xlu0 %v1208, 96
        %v1210 = vpop.permute.xlu0 %1209
        %v1212 = vsel %vm1093, %v1205, 0
        %v1215 = vsel %vm1093, %v1210, 0
        %1217 = vmatpush.bf16.xpose.msra.mxu0 0
        %1218 = vmatpush.bf16.xpose.msra.mxu0 0
        %1219 = vmatpush.bf16.xpose.msra.mxu0 0
        %1220 = vmatpush.bf16.xpose.msra.mxu0 0
        %1221 = vmatpush.bf16.xpose.msra.mxu0 0
        %1222 = vmatpush.bf16.xpose.msra.mxu0 0
        %1223 = vmatpush.bf16.xpose.msra.mxu0 0
        %1224 = vmatpush.bf16.xpose.msra.mxu0 %v1215
        %1225 = vmatmul.bf16.gmra.mxu0 %v1212
        %v1226 = vpop.f32.mrf.mxu0
        %v1227 = vadd.f32 %v1089, %v1226
        %v1228 = vpop.f32.mrf.mxu0
        %1229 = vdwg.mxu0
        %v1231 = vunpack.c.l.b16 %v1082
        %v1232 = vpack.c.b16 %v1231, %v1231
        %1233 = vrot.lane.b32.xlu0 %v1232, 96
        %v1234 = vpop.permute.xlu0 %1233
        %v1236 = vunpack.c.l.b16 %v1084
        %v1237 = vpack.c.b16 %v1236, %v1236
        %1238 = vrot.lane.b32.xlu0 %v1237, 96
        %v1239 = vpop.permute.xlu0 %1238
        %v1241 = vsel %vm1093, %v1234, 0
        %v1244 = vsel %vm1093, %v1239, 0
        %1246 = vmatpush.bf16.xpose.msra.mxu0 0
        %1247 = vmatpush.bf16.xpose.msra.mxu0 0
        %1248 = vmatpush.bf16.xpose.msra.mxu0 0
        %1249 = vmatpush.bf16.xpose.msra.mxu0 0
        %1250 = vmatpush.bf16.xpose.msra.mxu0 0
        %1251 = vmatpush.bf16.xpose.msra.mxu0 0
        %1252 = vmatpush.bf16.xpose.msra.mxu0 0
        %1253 = vmatpush.bf16.xpose.msra.mxu0 %v1244
        %1254 = vmatmul.bf16.gmra.mxu0 %v1241
        %v1255 = vpop.f32.mrf.mxu0
        %v1256 = vadd.f32 %v1090, %v1255
        %v1257 = vpop.f32.mrf.mxu0
        %1258 = vdwg.mxu0
        %v1259 = vsel %vm1132, %v1227, -inf
        %1260 = vmax.xlane.f32.xlu0 %v1259
        %v1261 = vpop.xlane.xlu0 %1260
        %v1262 = vsel %vm1132, %v1256, -inf
        %1263 = vmax.xlane.f32.xlu0 %v1262
        %v1264 = vpop.xlane.xlu0 %1263
        %v1265 = vsub.f32 %v1227, %v1261
        %v1266 = vsub.f32 %v1256, %v1264
        %v1267 = vmul.f32 %v1265, 1.442695
        %v1268 = vpow.pop %v1267
        %v1269 = vmul.f32 %v1266, 1.442695
        %v1270 = vpow.pop %v1269
        %v1271 = vsel %vm1132, %v1268, 0.0
        %1272 = vadd.xlane.f32.xlu0 %v1271
        %v1273 = vpop.xlane.xlu0 %1272
        %v1274 = vsel %vm1132, %v1270, 0.0
        %1275 = vadd.xlane.f32.xlu0 %v1274
        %v1276 = vpop.xlane.xlu0 %1275
        %v1277 = vrcp.pop %v1273
        %v1278 = vrcp.pop %v1276
        %v1279 = vpack.c.bf16 %v1268, %v1268
        %v1280 = vpack.c.bf16 %v1270, %v1270
        %v1282 = vunpack.c.l.b16 %v1085
        %v1283 = vpack.c.b16 %v1282, %v1282
        %1284 = vrot.lane.b32.xlu0 %v1283, 96
        %v1285 = vpop.permute.xlu0 %1284
        %v1287 = vsel %vm1132, %v1279, 0
        %v1290 = vsel %vm1158, %v1285, 0
        %1292 = vmatpush.bf16.msra.mxu0 0
        %1293 = vmatpush.bf16.msra.mxu0 0
        %1294 = vmatpush.bf16.msra.mxu0 0
        %1295 = vmatpush.bf16.msra.mxu0 0
        %1296 = vmatpush.bf16.msra.mxu0 0
        %1297 = vmatpush.bf16.msra.mxu0 0
        %1298 = vmatpush.bf16.msra.mxu0 0
        %1299 = vmatpush.bf16.msra.mxu0 %v1290
        %1300 = vmatmul.bf16.gmra.mxu0 %v1287
        %v1301 = vpop.f32.mrf.mxu0
        %v1302 = vadd.f32 0.0, %v1301
        %v1303 = vpop.f32.mrf.mxu0
        %1304 = vdwg.mxu0
        %v1306 = vunpack.c.l.b16 %v1086
        %v1307 = vpack.c.b16 %v1306, %v1306
        %1308 = vrot.lane.b32.xlu0 %v1307, 96
        %v1309 = vpop.permute.xlu0 %1308
        %v1311 = vsel %vm1132, %v1280, 0
        %v1314 = vsel %vm1158, %v1309, 0
        %1316 = vmatpush.bf16.msra.mxu0 0
        %1317 = vmatpush.bf16.msra.mxu0 0
        %1318 = vmatpush.bf16.msra.mxu0 0
        %1319 = vmatpush.bf16.msra.mxu0 0
        %1320 = vmatpush.bf16.msra.mxu0 0
        %1321 = vmatpush.bf16.msra.mxu0 0
        %1322 = vmatpush.bf16.msra.mxu0 0
        %1323 = vmatpush.bf16.msra.mxu0 %v1314
        %1324 = vmatmul.bf16.gmra.mxu0 %v1311
        %v1325 = vpop.f32.mrf.mxu0
        %v1326 = vadd.f32 0.0, %v1325
        %v1327 = vpop.f32.mrf.mxu0
        %1328 = vdwg.mxu0
        %v1329 = vmul.f32 %v1302, %v1277
        %v1330 = vmul.f32 %v1326, %v1278
        %v1331 = vpack.c.bf16 %v1329, %v1329
        %v1332 = vpack.c.bf16 %v1330, %v1330
        %1335 = vrot.lane.b32.xlu0 %v1331, 32
        %v1336 = vpop.permute.xlu0 %1335
        %1337 = vrot.lane.b32.xlu0 %v1332, 32
        %v1338 = vpop.permute.xlu0 %1337
        %vm1341 = vcmask 519424
        %1342 = vst.msk [vmem:[#allocation3] sm:$0xf] %vm1341, %v1336
        %1343 = vst.msk [vmem:[#allocation3 + $0x4] sm:$0xf] %vm1341, %v1338
        %1344 = vrot.lane.b32.xlu0 %v1203, 64
        %v1345 = vpop.permute.xlu0 %1344
        %1346 = vrot.lane.b32.xlu0 %v1208, 64
        %v1347 = vpop.permute.xlu0 %1346
        %v1349 = vsel %vm1093, %v1345, 0
        %v1352 = vsel %vm1093, %v1347, 0
        %1354 = vmatpush.bf16.xpose.msra.mxu0 0
        %1355 = vmatpush.bf16.xpose.msra.mxu0 0
        %1356 = vmatpush.bf16.xpose.msra.mxu0 0
        %1357 = vmatpush.bf16.xpose.msra.mxu0 0
        %1358 = vmatpush.bf16.xpose.msra.mxu0 0
        %1359 = vmatpush.bf16.xpose.msra.mxu0 0
        %1360 = vmatpush.bf16.xpose.msra.mxu0 0
        %1361 = vmatpush.bf16.xpose.msra.mxu0 %v1352
        %1362 = vmatmul.bf16.gmra.mxu0 %v1349
        %v1363 = vpop.f32.mrf.mxu0
        %v1364 = vadd.f32 %v1089, %v1363
        %v1365 = vpop.f32.mrf.mxu0
        %1366 = vdwg.mxu0
        %1367 = vrot.lane.b32.xlu0 %v1232, 64
        %v1368 = vpop.permute.xlu0 %1367
        %1369 = vrot.lane.b32.xlu0 %v1237, 64
        %v1370 = vpop.permute.xlu0 %1369
        %v1372 = vsel %vm1093, %v1368, 0
        %v1375 = vsel %vm1093, %v1370, 0
        %1377 = vmatpush.bf16.xpose.msra.mxu0 0
        %1378 = vmatpush.bf16.xpose.msra.mxu0 0
        %1379 = vmatpush.bf16.xpose.msra.mxu0 0
        %1380 = vmatpush.bf16.xpose.msra.mxu0 0
        %1381 = vmatpush.bf16.xpose.msra.mxu0 0
        %1382 = vmatpush.bf16.xpose.msra.mxu0 0
        %1383 = vmatpush.bf16.xpose.msra.mxu0 0
        %1384 = vmatpush.bf16.xpose.msra.mxu0 %v1375
        %1385 = vmatmul.bf16.gmra.mxu0 %v1372
        %v1386 = vpop.f32.mrf.mxu0
        %v1387 = vadd.f32 %v1090, %v1386
        %v1388 = vpop.f32.mrf.mxu0
        %1389 = vdwg.mxu0
        %v1390 = vsel %vm1132, %v1364, -inf
        %1391 = vmax.xlane.f32.xlu0 %v1390
        %v1392 = vpop.xlane.xlu0 %1391
        %v1393 = vsel %vm1132, %v1387, -inf
        %1394 = vmax.xlane.f32.xlu0 %v1393
        %v1395 = vpop.xlane.xlu0 %1394
        %v1396 = vsub.f32 %v1364, %v1392
        %v1397 = vsub.f32 %v1387, %v1395
        %v1398 = vmul.f32 %v1396, 1.442695
        %v1399 = vpow.pop %v1398
        %v1400 = vmul.f32 %v1397, 1.442695
        %v1401 = vpow.pop %v1400
        %v1402 = vsel %vm1132, %v1399, 0.0
        %1403 = vadd.xlane.f32.xlu0 %v1402
        %v1404 = vpop.xlane.xlu0 %1403
        %v1405 = vsel %vm1132, %v1401, 0.0
        %1406 = vadd.xlane.f32.xlu0 %v1405
        %v1407 = vpop.xlane.xlu0 %1406
        %v1408 = vrcp.pop %v1404
        %v1409 = vrcp.pop %v1407
        %v1410 = vpack.c.bf16 %v1399, %v1399
        %v1411 = vpack.c.bf16 %v1401, %v1401
        %1412 = vrot.lane.b32.xlu0 %v1283, 64
        %v1413 = vpop.permute.xlu0 %1412
        %v1415 = vsel %vm1132, %v1410, 0
        %v1418 = vsel %vm1158, %v1413, 0
        %1420 = vmatpush.bf16.msra.mxu0 0
        %1421 = vmatpush.bf16.msra.mxu0 0
        %1422 = vmatpush.bf16.msra.mxu0 0
        %1423 = vmatpush.bf16.msra.mxu0 0
        %1424 = vmatpush.bf16.msra.mxu0 0
        %1425 = vmatpush.bf16.msra.mxu0 0
        %1426 = vmatpush.bf16.msra.mxu0 0
        %1427 = vmatpush.bf16.msra.mxu0 %v1418
        %1428 = vmatmul.bf16.gmra.mxu0 %v1415
        %v1429 = vpop.f32.mrf.mxu0
        %v1430 = vadd.f32 0.0, %v1429
        %v1431 = vpop.f32.mrf.mxu0
        %1432 = vdwg.mxu0
        %1433 = vrot.lane.b32.xlu0 %v1307, 64
        %v1434 = vpop.permute.xlu0 %1433
        %v1436 = vsel %vm1132, %v1411, 0
        %v1439 = vsel %vm1158, %v1434, 0
        %1441 = vmatpush.bf16.msra.mxu0 0
        %1442 = vmatpush.bf16.msra.mxu0 0
        %1443 = vmatpush.bf16.msra.mxu0 0
        %1444 = vmatpush.bf16.msra.mxu0 0
        %1445 = vmatpush.bf16.msra.mxu0 0
        %1446 = vmatpush.bf16.msra.mxu0 0
        %1447 = vmatpush.bf16.msra.mxu0 0
        %1448 = vmatpush.bf16.msra.mxu0 %v1439
        %1449 = vmatmul.bf16.gmra.mxu0 %v1436
        %v1450 = vpop.f32.mrf.mxu0
        %v1451 = vadd.f32 0.0, %v1450
        %v1452 = vpop.f32.mrf.mxu0
        %1453 = vdwg.mxu0
        %v1454 = vmul.f32 %v1430, %v1408
        %v1455 = vmul.f32 %v1451, %v1409
        %v1456 = vpack.c.bf16 %v1454, %v1454
        %v1457 = vpack.c.bf16 %v1455, %v1455
        %1460 = vrot.lane.b32.xlu0 %v1456, 64
        %v1461 = vpop.permute.xlu0 %1460
        %1462 = vrot.lane.b32.xlu0 %v1457, 64
        %v1463 = vpop.permute.xlu0 %1462
        %vm1466 = vcmask 781824
        %1467 = vst.msk [vmem:[#allocation3] sm:$0xf] %vm1466, %v1461
        %1468 = vst.msk [vmem:[#allocation3 + $0x4] sm:$0xf] %vm1466, %v1463
        %1469 = vrot.lane.b32.xlu0 %v1203, 32
        %v1470 = vpop.permute.xlu0 %1469
        %1471 = vrot.lane.b32.xlu0 %v1208, 32
        %v1472 = vpop.permute.xlu0 %1471
        %v1474 = vsel %vm1093, %v1470, 0
        %v1477 = vsel %vm1093, %v1472, 0
        %1479 = vmatpush.bf16.xpose.msra.mxu0 0
        %1480 = vmatpush.bf16.xpose.msra.mxu0 0
        %1481 = vmatpush.bf16.xpose.msra.mxu0 0
        %1482 = vmatpush.bf16.xpose.msra.mxu0 0
        %1483 = vmatpush.bf16.xpose.msra.mxu0 0
        %1484 = vmatpush.bf16.xpose.msra.mxu0 0
        %1485 = vmatpush.bf16.xpose.msra.mxu0 0
        %1486 = vmatpush.bf16.xpose.msra.mxu0 %v1477
        %1487 = vmatmul.bf16.gmra.mxu0 %v1474
        %v1488 = vpop.f32.mrf.mxu0
        %v1489 = vadd.f32 %v1089, %v1488
        %v1490 = vpop.f32.mrf.mxu0
        %1491 = vdwg.mxu0
        %1492 = vrot.lane.b32.xlu0 %v1232, 32
        %v1493 = vpop.permute.xlu0 %1492
        %1494 = vrot.lane.b32.xlu0 %v1237, 32
        %v1495 = vpop.permute.xlu0 %1494
        %v1497 = vsel %vm1093, %v1493, 0
        %v1500 = vsel %vm1093, %v1495, 0
        %1502 = vmatpush.bf16.xpose.msra.mxu0 0
        %1503 = vmatpush.bf16.xpose.msra.mxu0 0
        %1504 = vmatpush.bf16.xpose.msra.mxu0 0
        %1505 = vmatpush.bf16.xpose.msra.mxu0 0
        %1506 = vmatpush.bf16.xpose.msra.mxu0 0
        %1507 = vmatpush.bf16.xpose.msra.mxu0 0
        %1508 = vmatpush.bf16.xpose.msra.mxu0 0
        %1509 = vmatpush.bf16.xpose.msra.mxu0 %v1500
        %1510 = vmatmul.bf16.gmra.mxu0 %v1497
        %v1511 = vpop.f32.mrf.mxu0
        %v1512 = vadd.f32 %v1090, %v1511
        %v1513 = vpop.f32.mrf.mxu0
        %1514 = vdwg.mxu0
        %v1515 = vsel %vm1132, %v1489, -inf
        %1516 = vmax.xlane.f32.xlu0 %v1515
        %v1517 = vpop.xlane.xlu0 %1516
        %v1518 = vsel %vm1132, %v1512, -inf
        %1519 = vmax.xlane.f32.xlu0 %v1518
        %v1520 = vpop.xlane.xlu0 %1519
        %v1521 = vsub.f32 %v1489, %v1517
        %v1522 = vsub.f32 %v1512, %v1520
        %v1523 = vmul.f32 %v1521, 1.442695
        %v1524 = vpow.pop %v1523
        %v1525 = vmul.f32 %v1522, 1.442695
        %v1526 = vpow.pop %v1525
        %v1527 = vsel %vm1132, %v1524, 0.0
        %1528 = vadd.xlane.f32.xlu0 %v1527
        %v1529 = vpop.xlane.xlu0 %1528
        %v1530 = vsel %vm1132, %v1526, 0.0
        %1531 = vadd.xlane.f32.xlu0 %v1530
        %v1532 = vpop.xlane.xlu0 %1531
        %v1533 = vrcp.pop %v1529
        %v1534 = vrcp.pop %v1532
        %v1535 = vpack.c.bf16 %v1524, %v1524
        %v1536 = vpack.c.bf16 %v1526, %v1526
        %1537 = vrot.lane.b32.xlu0 %v1283, 32
        %v1538 = vpop.permute.xlu0 %1537
        %v1540 = vsel %vm1132, %v1535, 0
        %v1543 = vsel %vm1158, %v1538, 0
        %1545 = vmatpush.bf16.msra.mxu0 0
        %1546 = vmatpush.bf16.msra.mxu0 0
        %1547 = vmatpush.bf16.msra.mxu0 0
        %1548 = vmatpush.bf16.msra.mxu0 0
        %1549 = vmatpush.bf16.msra.mxu0 0
        %1550 = vmatpush.bf16.msra.mxu0 0
        %1551 = vmatpush.bf16.msra.mxu0 0
        %1552 = vmatpush.bf16.msra.mxu0 %v1543
        %1553 = vmatmul.bf16.gmra.mxu0 %v1540
        %v1554 = vpop.f32.mrf.mxu0
        %v1555 = vadd.f32 0.0, %v1554
        %v1556 = vpop.f32.mrf.mxu0
        %1557 = vdwg.mxu0
        %1558 = vrot.lane.b32.xlu0 %v1307, 32
        %v1559 = vpop.permute.xlu0 %1558
        %v1561 = vsel %vm1132, %v1536, 0
        %v1564 = vsel %vm1158, %v1559, 0
        %1566 = vmatpush.bf16.msra.mxu0 0
        %1567 = vmatpush.bf16.msra.mxu0 0
        %1568 = vmatpush.bf16.msra.mxu0 0
        %1569 = vmatpush.bf16.msra.mxu0 0
        %1570 = vmatpush.bf16.msra.mxu0 0
        %1571 = vmatpush.bf16.msra.mxu0 0
        %1572 = vmatpush.bf16.msra.mxu0 0
        %1573 = vmatpush.bf16.msra.mxu0 %v1564
        %1574 = vmatmul.bf16.gmra.mxu0 %v1561
        %v1575 = vpop.f32.mrf.mxu0
        %v1576 = vadd.f32 0.0, %v1575
        %v1577 = vpop.f32.mrf.mxu0
        %1578 = vdwg.mxu0
        %v1579 = vmul.f32 %v1555, %v1533
        %v1580 = vmul.f32 %v1576, %v1534
        %v1581 = vpack.c.bf16 %v1579, %v1579
        %v1582 = vpack.c.bf16 %v1580, %v1580
        %1585 = vrot.lane.b32.xlu0 %v1581, 96
        %v1586 = vpop.permute.xlu0 %1585
        %1587 = vrot.lane.b32.xlu0 %v1582, 96
        %v1588 = vpop.permute.xlu0 %1587
        %vm1591 = vcmask 1044224
        %1592 = vst.msk [vmem:[#allocation3] sm:$0xf] %vm1591, %v1586
        %1593 = vst.msk [vmem:[#allocation3 + $0x4] sm:$0xf] %vm1591, %v1588
        %v1594 = vld [vmem:[#allocation3] sm:$0xf]
        %v1595 = vld [vmem:[#allocation3 + $0x4] sm:$0xf]
        %v1596 = vld [vmem:[%s761] sm:$0xf]
        %v1597 = vld [vmem:[%s761 + $0x4] sm:$0xf]
        %v1598 = vld [vmem:[%s761 + $0x8] sm:$0xf]
        %v1599 = vld [vmem:[%s761 + $0xc] sm:$0xf]
        %v1600 = vld [vmem:[%s761 + $0x10] sm:$0xf]
        %v1601 = vld [vmem:[%s761 + $0x14] sm:$0xf]
        %v1602 = vld [vmem:[%s761 + $0x18] sm:$0xf]
        %v1603 = vld [vmem:[%s761 + $0x1c] sm:$0xf]
        %v1604 = vld [vmem:[%s761 + $0x20] sm:$0xf]
        %v1605 = vld [vmem:[%s761 + $0x24] sm:$0xf]
        %v1606 = vld [vmem:[%s761 + $0x28] sm:$0xf]
        %v1607 = vld [vmem:[%s761 + $0x2c] sm:$0xf]
        %v1608 = vld [vmem:[%s761 + $0x30] sm:$0xf]
        %v1609 = vld [vmem:[%s761 + $0x34] sm:$0xf]
        %v1610 = vld [vmem:[%s761 + $0x38] sm:$0xf]
        %v1611 = vld [vmem:[%s761 + $0x3c] sm:$0xf]
        %v1612 = vld [vmem:[%s764] sm:$0x1]
        %v1614 = vperm.slane %v1612, 0
        %v1618 = vunpack.c.l.b16 %v1594
        %v1619 = vunpack.c.l.b16 %v1595
        %v1620 = vpack.c.b16 %v1619, %v1618
        %v1638 = vunpack.c.l.b16 %v1596
        %v1639 = vunpack.c.l.b16 %v1597
        %v1640 = vunpack.c.l.b16 %v1598
        %v1641 = vunpack.c.l.b16 %v1599
        %v1642 = vunpack.c.l.b16 %v1600
        %v1643 = vunpack.c.l.b16 %v1601
        %v1644 = vunpack.c.l.b16 %v1602
        %v1645 = vunpack.c.l.b16 %v1603
        %v1646 = vunpack.c.l.b16 %v1604
        %v1647 = vunpack.c.l.b16 %v1605
        %v1648 = vunpack.c.l.b16 %v1606
        %v1649 = vunpack.c.l.b16 %v1607
        %v1650 = vunpack.c.l.b16 %v1608
        %v1651 = vunpack.c.l.b16 %v1609
        %v1652 = vunpack.c.l.b16 %v1610
        %v1653 = vunpack.c.l.b16 %v1611
        %v1654 = vpack.c.b16 %v1639, %v1638
        %v1655 = vpack.c.b16 %v1641, %v1640
        %v1656 = vpack.c.b16 %v1643, %v1642
        %v1657 = vpack.c.b16 %v1645, %v1644
        %v1658 = vpack.c.b16 %v1647, %v1646
        %v1659 = vpack.c.b16 %v1649, %v1648
        %v1660 = vpack.c.b16 %v1651, %v1650
        %v1661 = vpack.c.b16 %v1653, %v1652
        %1670 = vmatpush.bf16.msra.mxu0 %v1661
        %1671 = vmatpush.bf16.msra.mxu0 %v1660
        %1672 = vmatpush.bf16.msra.mxu0 %v1659
        %1673 = vmatpush.bf16.msra.mxu0 %v1658
        %1674 = vmatpush.bf16.msra.mxu0 %v1657
        %1675 = vmatpush.bf16.msra.mxu0 %v1656
        %1676 = vmatpush.bf16.msra.mxu0 %v1655
        %1677 = vmatpush.bf16.msra.mxu0 %v1654
        %1678 = vmatmul.bf16.gmra.mxu0 %v1620
        %v1679 = vpop.f32.mrf.mxu0
        %v1680 = vadd.f32 %v1614, %v1679
        %v1681 = vpop.f32.mrf.mxu0
        %v1682 = vadd.f32 %v1614, %v1681
        %1683 = vdwg.mxu0
        %v1684 = vadd.f32 %v866, %v1680
        %v1685 = vadd.f32 %v867, %v1682
        %v1686 = vld [vmem:[%s767] sm:$0x1]
        %v1687 = vld [vmem:[%s770] sm:$0x1]
        %1688 = vadd.xlane.f32.xlu0 %v1684
        %v1689 = vpop.xlane.xlu0 %1688
        %1690 = vadd.xlane.f32.xlu0 %v1685
        %v1691 = vpop.xlane.xlu0 %1690
        %v1692 = vrcp.pop 128.0
        %v1693 = vmul.f32 128.0, %v1692
        %v1694 = vsub.f32 1.0, %v1693
        %v1695 = vmul.f32 %v1692, %v1694
        %v1696 = vadd.f32 %v1692, %v1695
        %vm1697 = vweird.f32 %v1692
        %v1698 = vsel %vm1697, %v1692, %v1696
        %v1699 = vmul.f32 %v1689, %v1698
        %v1700 = vmul.f32 %v1691, %v1698
        %v1701 = vmul.f32 %v1684, %v1684
        %v1702 = vmul.f32 %v1685, %v1685
        %1703 = vadd.xlane.f32.xlu0 %v1701
        %v1704 = vpop.xlane.xlu0 %1703
        %1705 = vadd.xlane.f32.xlu0 %v1702
        %v1706 = vpop.xlane.xlu0 %1705
        %v1707 = vmul.f32 %v1704, %v1698
        %v1708 = vmul.f32 %v1706, %v1698
        %v1709 = vmul.f32 %v1699, %v1699
        %v1710 = vmul.f32 %v1700, %v1700
        %v1711 = vsub.f32 %v1707, %v1709
        %v1712 = vsub.f32 %v1708, %v1710
        %v1713 = vsub.f32 %v1684, %v1699
        %v1714 = vsub.f32 %v1685, %v1700
        %v1715 = vadd.f32 %v1711, 1e-12
        %v1716 = vadd.f32 %v1712, 1e-12
        %v1717 = vrsqrt.pop %v1715
        %v1718 = vmul.f32 %v1717, %v1715
        %v1719 = vmul.f32 %v1718, %v1717
        %v1720 = vmul.f32 0.5, %v1719
        %v1721 = vsub.f32 1.5, %v1720
        %v1722 = vmul.f32 %v1717, %v1721
        %vm1723 = vweird.f32 %v1715
        %vm1724 = vweird.f32 %v1717
        %vm1725 = vmor %vm1723, %vm1724
        %v1726 = vsel %vm1725, %v1717, %v1722
        %v1727 = vrsqrt.pop %v1716
        %v1728 = vmul.f32 %v1727, %v1716
        %v1729 = vmul.f32 %v1728, %v1727
        %v1730 = vmul.f32 0.5, %v1729
        %v1731 = vsub.f32 1.5, %v1730
        %v1732 = vmul.f32 %v1727, %v1731
        %vm1733 = vweird.f32 %v1716
        %vm1734 = vweird.f32 %v1727
        %vm1735 = vmor %vm1733, %vm1734
        %v1736 = vsel %vm1735, %v1727, %v1732
        %v1737 = vmul.f32 %v1713, %v1726
        %v1738 = vmul.f32 %v1714, %v1736
        %v1740 = vperm.slane %v1686, 0
        %v1742 = vmul.f32 %v1737, %v1740
        %v1743 = vmul.f32 %v1738, %v1740
        %v1745 = vperm.slane %v1687, 0
        %v1747 = vadd.f32 %v1742, %v1745
        %v1748 = vadd.f32 %v1743, %v1745
        %v1749 = vpack.c.bf16 %v1748, %v1747
        %v1750 = vld [vmem:[%s775] sm:$0xff]
        %v1751 = vld [vmem:[%s775 + $0x8] sm:$0xff]
        %v1752 = vld [vmem:[%s775 + $0x10] sm:$0xff]
        %v1753 = vld [vmem:[%s775 + $0x18] sm:$0xff]
        %v1754 = vld [vmem:[%s775 + $0x20] sm:$0xff]
        %v1755 = vld [vmem:[%s775 + $0x28] sm:$0xff]
        %v1756 = vld [vmem:[%s775 + $0x30] sm:$0xff]
        %v1757 = vld [vmem:[%s775 + $0x38] sm:$0xff]
        %v1758 = vld [vmem:[%s775 + $0x40] sm:$0xff]
        %v1759 = vld [vmem:[%s775 + $0x48] sm:$0xff]
        %v1760 = vld [vmem:[%s775 + $0x50] sm:$0xff]
        %v1761 = vld [vmem:[%s775 + $0x58] sm:$0xff]
        %v1762 = vld [vmem:[%s775 + $0x60] sm:$0xff]
        %v1763 = vld [vmem:[%s775 + $0x68] sm:$0xff]
        %v1764 = vld [vmem:[%s775 + $0x70] sm:$0xff]
        %v1765 = vld [vmem:[%s775 + $0x78] sm:$0xff]
        %v1766 = vld [vmem:[%s779] sm:$0x3]
        %v1768 = vperm.slane %v1766, 0
        %v1769 = vperm.slane %v1766, 1
        %v1788 = vunpack.c.l.b16 %v1750
        %v1789 = vunpack.c.h.b16 %v1750
        %v1790 = vunpack.c.l.b16 %v1751
        %v1791 = vunpack.c.h.b16 %v1751
        %v1792 = vunpack.c.l.b16 %v1752
        %v1793 = vunpack.c.h.b16 %v1752
        %v1794 = vunpack.c.l.b16 %v1753
        %v1795 = vunpack.c.h.b16 %v1753
        %v1796 = vunpack.c.l.b16 %v1754
        %v1797 = vunpack.c.h.b16 %v1754
        %v1798 = vunpack.c.l.b16 %v1755
        %v1799 = vunpack.c.h.b16 %v1755
        %v1800 = vunpack.c.l.b16 %v1756
        %v1801 = vunpack.c.h.b16 %v1756
        %v1802 = vunpack.c.l.b16 %v1757
        %v1803 = vunpack.c.h.b16 %v1757
        %v1804 = vunpack.c.l.b16 %v1758
        %v1805 = vunpack.c.h.b16 %v1758
        %v1806 = vunpack.c.l.b16 %v1759
        %v1807 = vunpack.c.h.b16 %v1759
        %v1808 = vunpack.c.l.b16 %v1760
        %v1809 = vunpack.c.h.b16 %v1760
        %v1810 = vunpack.c.l.b16 %v1761
        %v1811 = vunpack.c.h.b16 %v1761
        %v1812 = vunpack.c.l.b16 %v1762
        %v1813 = vunpack.c.h.b16 %v1762
        %v1814 = vunpack.c.l.b16 %v1763
        %v1815 = vunpack.c.h.b16 %v1763
        %v1816 = vunpack.c.l.b16 %v1764
        %v1817 = vunpack.c.h.b16 %v1764
        %v1818 = vunpack.c.l.b16 %v1765
        %v1819 = vunpack.c.h.b16 %v1765
        %v1820 = vpack.c.b16 %v1790, %v1788
        %v1821 = vpack.c.b16 %v1791, %v1789
        %v1822 = vpack.c.b16 %v1794, %v1792
        %v1823 = vpack.c.b16 %v1795, %v1793
        %v1824 = vpack.c.b16 %v1798, %v1796
        %v1825 = vpack.c.b16 %v1799, %v1797
        %v1826 = vpack.c.b16 %v1802, %v1800
        %v1827 = vpack.c.b16 %v1803, %v1801
        %v1828 = vpack.c.b16 %v1806, %v1804
        %v1829 = vpack.c.b16 %v1807, %v1805
        %v1830 = vpack.c.b16 %v1810, %v1808
        %v1831 = vpack.c.b16 %v1811, %v1809
        %v1832 = vpack.c.b16 %v1814, %v1812
        %v1833 = vpack.c.b16 %v1815, %v1813
        %v1834 = vpack.c.b16 %v1818, %v1816
        %v1835 = vpack.c.b16 %v1819, %v1817
        %1852 = vmatpush.bf16.msra.mxu0 %v1834
        %1853 = vmatpush.bf16.msra.mxu0 %v1832
        %1854 = vmatpush.bf16.msra.mxu0 %v1830
        %1855 = vmatpush.bf16.msra.mxu0 %v1828
        %1856 = vmatpush.bf16.msra.mxu0 %v1826
        %1857 = vmatpush.bf16.msra.mxu0 %v1824
        %1858 = vmatpush.bf16.msra.mxu0 %v1822
        %1859 = vmatpush.bf16.msra.mxu0 %v1820
        %1860 = vmatmul.bf16.gmra.mxu0 %v1749
        %v1861 = vpop.f32.mrf.mxu0
        %v1862 = vadd.f32 %v1768, %v1861
        %v1863 = vpop.f32.mrf.mxu0
        %v1864 = vadd.f32 %v1768, %v1863
        %1865 = vdwg.mxu0
        %1866 = vmatpush.bf16.msra.mxu0 %v1835
        %1867 = vmatpush.bf16.msra.mxu0 %v1833
        %1868 = vmatpush.bf16.msra.mxu0 %v1831
        %1869 = vmatpush.bf16.msra.mxu0 %v1829
        %1870 = vmatpush.bf16.msra.mxu0 %v1827
        %1871 = vmatpush.bf16.msra.mxu0 %v1825
        %1872 = vmatpush.bf16.msra.mxu0 %v1823
        %1873 = vmatpush.bf16.msra.mxu0 %v1821
        %1874 = vmatmul.bf16.gmra.mxu0 %v1749
        %v1875 = vpop.f32.mrf.mxu0
        %v1876 = vadd.f32 %v1769, %v1875
        %v1877 = vpop.f32.mrf.mxu0
        %v1878 = vadd.f32 %v1769, %v1877
        %1879 = vdwg.mxu0
        %v1880 = vmul.f32 %v1862, %v1862
        %v1881 = vmul.f32 %v1876, %v1876
        %v1882 = vmul.f32 %v1864, %v1864
        %v1883 = vmul.f32 %v1878, %v1878
        %v1884 = vmul.f32 %v1862, %v1880
        %v1885 = vmul.f32 %v1876, %v1881
        %v1886 = vmul.f32 %v1864, %v1882
        %v1887 = vmul.f32 %v1878, %v1883
        %v1888 = vmul.f32 %v1884, 0.044715
        %v1889 = vmul.f32 %v1885, 0.044715
        %v1890 = vmul.f32 %v1886, 0.044715
        %v1891 = vmul.f32 %v1887, 0.044715
        %v1892 = vadd.f32 %v1862, %v1888
        %v1893 = vadd.f32 %v1876, %v1889
        %v1894 = vadd.f32 %v1864, %v1890
        %v1895 = vadd.f32 %v1878, %v1891
        %v1896 = vmul.f32 %v1892, 0.7978846
        %v1897 = vmul.f32 %v1893, 0.7978846
        %v1898 = vmul.f32 %v1894, 0.7978846
        %v1899 = vmul.f32 %v1895, 0.7978846
        %v1900 = vtanh.pop %v1896
        %v1901 = vtanh.pop %v1897
        %v1902 = vtanh.pop %v1898
        %v1903 = vtanh.pop %v1899
        %v1904 = vadd.f32 %v1900, 1.0
        %v1905 = vadd.f32 %v1901, 1.0
        %v1906 = vadd.f32 %v1902, 1.0
        %v1907 = vadd.f32 %v1903, 1.0
        %v1908 = vmul.f32 %v1904, 0.5
        %v1909 = vmul.f32 %v1905, 0.5
        %v1910 = vmul.f32 %v1906, 0.5
        %v1911 = vmul.f32 %v1907, 0.5
        %v1912 = vmul.f32 %v1862, %v1908
        %v1913 = vmul.f32 %v1876, %v1909
        %v1914 = vmul.f32 %v1864, %v1910
        %v1915 = vmul.f32 %v1878, %v1911
        %v1916 = vpack.c.bf16 %v1914, %v1912
        %v1917 = vpack.c.bf16 %v1915, %v1913
        %v1918 = vld [vmem:[%s784] sm:$0xf]
        %v1919 = vld [vmem:[%s784 + $0x4] sm:$0xf]
        %v1920 = vld [vmem:[%s784 + $0x8] sm:$0xf]
        %v1921 = vld [vmem:[%s784 + $0xc] sm:$0xf]
        %v1922 = vld [vmem:[%s784 + $0x10] sm:$0xf]
        %v1923 = vld [vmem:[%s784 + $0x14] sm:$0xf]
        %v1924 = vld [vmem:[%s784 + $0x18] sm:$0xf]
        %v1925 = vld [vmem:[%s784 + $0x1c] sm:$0xf]
        %v1926 = vld [vmem:[%s784 + $0x20] sm:$0xf]
        %v1927 = vld [vmem:[%s784 + $0x24] sm:$0xf]
        %v1928 = vld [vmem:[%s784 + $0x28] sm:$0xf]
        %v1929 = vld [vmem:[%s784 + $0x2c] sm:$0xf]
        %v1930 = vld [vmem:[%s784 + $0x30] sm:$0xf]
        %v1931 = vld [vmem:[%s784 + $0x34] sm:$0xf]
        %v1932 = vld [vmem:[%s784 + $0x38] sm:$0xf]
        %v1933 = vld [vmem:[%s784 + $0x3c] sm:$0xf]
        %v1934 = vld [vmem:[%s784 + $0x40] sm:$0xf]
        %v1935 = vld [vmem:[%s784 + $0x44] sm:$0xf]
        %v1936 = vld [vmem:[%s784 + $0x48] sm:$0xf]
        %v1937 = vld [vmem:[%s784 + $0x4c] sm:$0xf]
        %v1938 = vld [vmem:[%s784 + $0x50] sm:$0xf]
        %v1939 = vld [vmem:[%s784 + $0x54] sm:$0xf]
        %v1940 = vld [vmem:[%s784 + $0x58] sm:$0xf]
        %v1941 = vld [vmem:[%s784 + $0x5c] sm:$0xf]
        %v1942 = vld [vmem:[%s784 + $0x60] sm:$0xf]
        %v1943 = vld [vmem:[%s784 + $0x64] sm:$0xf]
        %v1944 = vld [vmem:[%s784 + $0x68] sm:$0xf]
        %v1945 = vld [vmem:[%s784 + $0x6c] sm:$0xf]
        %v1946 = vld [vmem:[%s784 + $0x70] sm:$0xf]
        %v1947 = vld [vmem:[%s784 + $0x74] sm:$0xf]
        %v1948 = vld [vmem:[%s784 + $0x78] sm:$0xf]
        %v1949 = vld [vmem:[%s784 + $0x7c] sm:$0xf]
        %v1950 = vld [vmem:[%s787] sm:$0x1]
        %v1952 = vperm.slane %v1950, 0
        %v1986 = vunpack.c.l.b16 %v1918
        %v1987 = vunpack.c.l.b16 %v1919
        %v1988 = vunpack.c.l.b16 %v1920
        %v1989 = vunpack.c.l.b16 %v1921
        %v1990 = vunpack.c.l.b16 %v1922
        %v1991 = vunpack.c.l.b16 %v1923
        %v1992 = vunpack.c.l.b16 %v1924
        %v1993 = vunpack.c.l.b16 %v1925
        %v1994 = vunpack.c.l.b16 %v1926
        %v1995 = vunpack.c.l.b16 %v1927
        %v1996 = vunpack.c.l.b16 %v1928
        %v1997 = vunpack.c.l.b16 %v1929
        %v1998 = vunpack.c.l.b16 %v1930
        %v1999 = vunpack.c.l.b16 %v1931
        %v2000 = vunpack.c.l.b16 %v1932
        %v2001 = vunpack.c.l.b16 %v1933
        %v2002 = vunpack.c.l.b16 %v1934
        %v2003 = vunpack.c.l.b16 %v1935
        %v2004 = vunpack.c.l.b16 %v1936
        %v2005 = vunpack.c.l.b16 %v1937
        %v2006 = vunpack.c.l.b16 %v1938
        %v2007 = vunpack.c.l.b16 %v1939
        %v2008 = vunpack.c.l.b16 %v1940
        %v2009 = vunpack.c.l.b16 %v1941
        %v2010 = vunpack.c.l.b16 %v1942
        %v2011 = vunpack.c.l.b16 %v1943
        %v2012 = vunpack.c.l.b16 %v1944
        %v2013 = vunpack.c.l.b16 %v1945
        %v2014 = vunpack.c.l.b16 %v1946
        %v2015 = vunpack.c.l.b16 %v1947
        %v2016 = vunpack.c.l.b16 %v1948
        %v2017 = vunpack.c.l.b16 %v1949
        %v2018 = vpack.c.b16 %v1987, %v1986
        %v2019 = vpack.c.b16 %v1989, %v1988
        %v2020 = vpack.c.b16 %v1991, %v1990
        %v2021 = vpack.c.b16 %v1993, %v1992
        %v2022 = vpack.c.b16 %v1995, %v1994
        %v2023 = vpack.c.b16 %v1997, %v1996
        %v2024 = vpack.c.b16 %v1999, %v1998
        %v2025 = vpack.c.b16 %v2001, %v2000
        %v2026 = vpack.c.b16 %v2003, %v2002
        %v2027 = vpack.c.b16 %v2005, %v2004
        %v2028 = vpack.c.b16 %v2007, %v2006
        %v2029 = vpack.c.b16 %v2009, %v2008
        %v2030 = vpack.c.b16 %v2011, %v2010
        %v2031 = vpack.c.b16 %v2013, %v2012
        %v2032 = vpack.c.b16 %v2015, %v2014
        %v2033 = vpack.c.b16 %v2017, %v2016
        %2050 = vmatpush.bf16.msra.mxu0 %v2025
        %2051 = vmatpush.bf16.msra.mxu0 %v2024
        %2052 = vmatpush.bf16.msra.mxu0 %v2023
        %2053 = vmatpush.bf16.msra.mxu0 %v2022
        %2054 = vmatpush.bf16.msra.mxu0 %v2021
        %2055 = vmatpush.bf16.msra.mxu0 %v2020
        %2056 = vmatpush.bf16.msra.mxu0 %v2019
        %2057 = vmatpush.bf16.msra.mxu0 %v2018
        %2058 = vmatmul.bf16.gmra.mxu0 %v1916
        %v2059 = vpop.f32.mrf.mxu0
        %v2060 = vadd.f32 %v1952, %v2059
        %v2061 = vpop.f32.mrf.mxu0
        %v2062 = vadd.f32 %v1952, %v2061
        %2063 = vdwg.mxu0
        %2064 = vmatpush.bf16.msra.mxu0 %v2033
        %2065 = vmatpush.bf16.msra.mxu0 %v2032
        %2066 = vmatpush.bf16.msra.mxu0 %v2031
        %2067 = vmatpush.bf16.msra.mxu0 %v2030
        %2068 = vmatpush.bf16.msra.mxu0 %v2029
        %2069 = vmatpush.bf16.msra.mxu0 %v2028
        %2070 = vmatpush.bf16.msra.mxu0 %v2027
        %2071 = vmatpush.bf16.msra.mxu0 %v2026
        %2072 = vmatmul.bf16.gmra.mxu0 %v1917
        %v2073 = vpop.f32.mrf.mxu0
        %v2074 = vadd.f32 %v2060, %v2073
        %v2075 = vpop.f32.mrf.mxu0
        %v2076 = vadd.f32 %v2062, %v2075
        %2077 = vdwg.mxu0
        %v2078 = vadd.f32 %v1747, %v2074
        %v2079 = vadd.f32 %v1748, %v2076
        %v2080 = vld [vmem:[%s790] sm:$0x1]
        %v2081 = vld [vmem:[%s793] sm:$0x1]
        %2082 = vadd.xlane.f32.xlu0 %v2078
        %v2083 = vpop.xlane.xlu0 %2082
        %2084 = vadd.xlane.f32.xlu0 %v2079
        %v2085 = vpop.xlane.xlu0 %2084
        %v2086 = vmul.f32 %v2083, %v1698
        %v2087 = vmul.f32 %v2085, %v1698
        %v2088 = vmul.f32 %v2078, %v2078
        %v2089 = vmul.f32 %v2079, %v2079
        %2090 = vadd.xlane.f32.xlu0 %v2088
        %v2091 = vpop.xlane.xlu0 %2090
        %2092 = vadd.xlane.f32.xlu0 %v2089
        %v2093 = vpop.xlane.xlu0 %2092
        %v2094 = vmul.f32 %v2091, %v1698
        %v2095 = vmul.f32 %v2093, %v1698
        %v2096 = vmul.f32 %v2086, %v2086
        %v2097 = vmul.f32 %v2087, %v2087
        %v2098 = vsub.f32 %v2094, %v2096
        %v2099 = vsub.f32 %v2095, %v2097
        %v2100 = vsub.f32 %v2078, %v2086
        %v2101 = vsub.f32 %v2079, %v2087
        %v2102 = vadd.f32 %v2098, 1e-12
        %v2103 = vadd.f32 %v2099, 1e-12
        %v2104 = vrsqrt.pop %v2102
        %v2105 = vmul.f32 %v2104, %v2102
        %v2106 = vmul.f32 %v2105, %v2104
        %v2107 = vmul.f32 0.5, %v2106
        %v2108 = vsub.f32 1.5, %v2107
        %v2109 = vmul.f32 %v2104, %v2108
        %vm2110 = vweird.f32 %v2102
        %vm2111 = vweird.f32 %v2104
        %vm2112 = vmor %vm2110, %vm2111
        %v2113 = vsel %vm2112, %v2104, %v2109
        %v2114 = vrsqrt.pop %v2103
        %v2115 = vmul.f32 %v2114, %v2103
        %v2116 = vmul.f32 %v2115, %v2114
        %v2117 = vmul.f32 0.5, %v2116
        %v2118 = vsub.f32 1.5, %v2117
        %v2119 = vmul.f32 %v2114, %v2118
        %vm2120 = vweird.f32 %v2103
        %vm2121 = vweird.f32 %v2114
        %vm2122 = vmor %vm2120, %vm2121
        %v2123 = vsel %vm2122, %v2114, %v2119
        %v2124 = vmul.f32 %v2100, %v2113
        %v2125 = vmul.f32 %v2101, %v2123
        %v2127 = vperm.slane %v2080, 0
        %v2129 = vmul.f32 %v2124, %v2127
        %v2130 = vmul.f32 %v2125, %v2127
        %v2132 = vperm.slane %v2081, 0
        %v2134 = vadd.f32 %v2129, %v2132
        %v2135 = vadd.f32 %v2130, %v2132
        %2136 = vst [vmem:[#allocation2] sm:$0xff] %v2134
        %2137 = vst [vmem:[#allocation2 + $0x8] sm:$0xff] %v2135
        %p2138 = scmp.eq.s32.totalorder %s32, 1
        // Predicated region
        $region105: #{bert_for_relations_forward.1} parent=99 // pred_check
          %p2139 = pneg %p2138
        $region106: #{bert_for_relations_forward.1} parent=99 // pred_check_branch
          %2141 = sbr.rel (%p2139) target = $region108
        $region107: #{bert_for_relations_forward.1} parent=99 // pred_region
          %v2142 = vpack.c.bf16 %v2134, %v2134
          %v2143 = vpack.c.bf16 %v2135, %v2135
          %v2144 = vld [vmem:[%s16] sm:$0xf]
          %v2145 = vld [vmem:[%s16 + $0x4] sm:$0xf]
          %v2146 = vld [vmem:[%s16 + $0x8] sm:$0xf]
          %v2147 = vld [vmem:[%s16 + $0xc] sm:$0xf]
          %v2148 = vld [vmem:[%s16 + $0x10] sm:$0xf]
          %v2149 = vld [vmem:[%s16 + $0x14] sm:$0xf]
          %v2150 = vld [vmem:[%s16 + $0x18] sm:$0xf]
          %v2151 = vld [vmem:[%s16 + $0x1c] sm:$0xf]
          %v2152 = vld [vmem:[%s16 + $0x20] sm:$0xf]
          %v2153 = vld [vmem:[%s16 + $0x24] sm:$0xf]
          %v2154 = vld [vmem:[%s16 + $0x28] sm:$0xf]
          %v2155 = vld [vmem:[%s16 + $0x2c] sm:$0xf]
          %v2156 = vld [vmem:[%s16 + $0x30] sm:$0xf]
          %v2157 = vld [vmem:[%s16 + $0x34] sm:$0xf]
          %v2158 = vld [vmem:[%s16 + $0x38] sm:$0xf]
          %v2159 = vld [vmem:[%s16 + $0x3c] sm:$0xf]
          %v2160 = vld [vmem:[%s17] sm:$0x1]
          %v2162 = vperm.slane %v2160, 0
          %v2166 = vunpack.c.l.b16 %v2142
          %v2167 = vunpack.c.l.b16 %v2143
          %v2168 = vrot.slane %v2167, 7
          %vm2169 = vcmask 1041409
          %v2170 = vsel %vm2169, %v2168, %v2166
          %v2171 = vpack.c.b16 %v2170, %v2170
          %v2189 = vunpack.c.l.b16 %v2144
          %v2190 = vunpack.c.l.b16 %v2145
          %v2191 = vunpack.c.l.b16 %v2146
          %v2192 = vunpack.c.l.b16 %v2147
          %v2193 = vunpack.c.l.b16 %v2148
          %v2194 = vunpack.c.l.b16 %v2149
          %v2195 = vunpack.c.l.b16 %v2150
          %v2196 = vunpack.c.l.b16 %v2151
          %v2197 = vunpack.c.l.b16 %v2152
          %v2198 = vunpack.c.l.b16 %v2153
          %v2199 = vunpack.c.l.b16 %v2154
          %v2200 = vunpack.c.l.b16 %v2155
          %v2201 = vunpack.c.l.b16 %v2156
          %v2202 = vunpack.c.l.b16 %v2157
          %v2203 = vunpack.c.l.b16 %v2158
          %v2204 = vunpack.c.l.b16 %v2159
          %v2205 = vpack.c.b16 %v2190, %v2189
          %v2206 = vpack.c.b16 %v2192, %v2191
          %v2207 = vpack.c.b16 %v2194, %v2193
          %v2208 = vpack.c.b16 %v2196, %v2195
          %v2209 = vpack.c.b16 %v2198, %v2197
          %v2210 = vpack.c.b16 %v2200, %v2199
          %v2211 = vpack.c.b16 %v2202, %v2201
          %v2212 = vpack.c.b16 %v2204, %v2203
          %2221 = vmatpush.bf16.msra.mxu0 %v2212
          %2222 = vmatpush.bf16.msra.mxu0 %v2211
          %2223 = vmatpush.bf16.msra.mxu0 %v2210
          %2224 = vmatpush.bf16.msra.mxu0 %v2209
          %2225 = vmatpush.bf16.msra.mxu0 %v2208
          %2226 = vmatpush.bf16.msra.mxu0 %v2207
          %2227 = vmatpush.bf16.msra.mxu0 %v2206
          %2228 = vmatpush.bf16.msra.mxu0 %v2205
          %2229 = vmatmul.bf16.gmra.mxu0 %v2171
          %v2230 = vpop.f32.mrf.mxu0
          %v2231 = vadd.f32 %v2162, %v2230
          %v2232 = vpop.f32.mrf.mxu0
          %2233 = vdwg.mxu0
          %v2234 = vtanh.pop %v2231
          %v2235 = vpack.c.bf16 %v2234, %v2234
          %v2236 = vld [vmem:[%s18] sm:$0xf]
          %v2237 = vld [vmem:[%s18 + $0x4] sm:$0xf]
          %v2238 = vld [vmem:[%s18 + $0x8] sm:$0xf]
          %v2239 = vld [vmem:[%s18 + $0xc] sm:$0xf]
          %v2240 = vld [vmem:[%s18 + $0x10] sm:$0xf]
          %v2241 = vld [vmem:[%s18 + $0x14] sm:$0xf]
          %v2242 = vld [vmem:[%s18 + $0x18] sm:$0xf]
          %v2243 = vld [vmem:[%s18 + $0x1c] sm:$0xf]
          %v2244 = vld [vmem:[%s18 + $0x20] sm:$0xf]
          %v2245 = vld [vmem:[%s18 + $0x24] sm:$0xf]
          %v2246 = vld [vmem:[%s18 + $0x28] sm:$0xf]
          %v2247 = vld [vmem:[%s18 + $0x2c] sm:$0xf]
          %v2248 = vld [vmem:[%s18 + $0x30] sm:$0xf]
          %v2249 = vld [vmem:[%s18 + $0x34] sm:$0xf]
          %v2250 = vld [vmem:[%s18 + $0x38] sm:$0xf]
          %v2251 = vld [vmem:[%s18 + $0x3c] sm:$0xf]
          %v2252 = vld [vmem:[%s19] sm:$0x1]
          %v2254 = vperm.slane %v2252, 0
          %v2272 = vunpack.c.l.b16 %v2236
          %v2273 = vunpack.c.l.b16 %v2237
          %v2274 = vunpack.c.l.b16 %v2238
          %v2275 = vunpack.c.l.b16 %v2239
          %v2276 = vunpack.c.l.b16 %v2240
          %v2277 = vunpack.c.l.b16 %v2241
          %v2278 = vunpack.c.l.b16 %v2242
          %v2279 = vunpack.c.l.b16 %v2243
          %v2280 = vunpack.c.l.b16 %v2244
          %v2281 = vunpack.c.l.b16 %v2245
          %v2282 = vunpack.c.l.b16 %v2246
          %v2283 = vunpack.c.l.b16 %v2247
          %v2284 = vunpack.c.l.b16 %v2248
          %v2285 = vunpack.c.l.b16 %v2249
          %v2286 = vunpack.c.l.b16 %v2250
          %v2287 = vunpack.c.l.b16 %v2251
          %v2288 = vpack.c.b16 %v2273, %v2272
          %v2289 = vpack.c.b16 %v2275, %v2274
          %v2290 = vpack.c.b16 %v2277, %v2276
          %v2291 = vpack.c.b16 %v2279, %v2278
          %v2292 = vpack.c.b16 %v2281, %v2280
          %v2293 = vpack.c.b16 %v2283, %v2282
          %v2294 = vpack.c.b16 %v2285, %v2284
          %v2295 = vpack.c.b16 %v2287, %v2286
          %2304 = vmatpush.bf16.msra.mxu0 %v2295
          %2305 = vmatpush.bf16.msra.mxu0 %v2294
          %2306 = vmatpush.bf16.msra.mxu0 %v2293
          %2307 = vmatpush.bf16.msra.mxu0 %v2292
          %2308 = vmatpush.bf16.msra.mxu0 %v2291
          %2309 = vmatpush.bf16.msra.mxu0 %v2290
          %2310 = vmatpush.bf16.msra.mxu0 %v2289
          %2311 = vmatpush.bf16.msra.mxu0 %v2288
          %2312 = vmatmul.bf16.gmra.mxu0 %v2235
          %v2313 = vpop.f32.mrf.mxu0
          %v2314 = vadd.f32 %v2254, %v2313
          %v2315 = vpop.f32.mrf.mxu0
          %2316 = vdwg.mxu0
          %2317 = vst [vmem:[#allocation4] sm:$0x3] %v2314
        $region108: #{bert_for_relations_forward.1} parent=99 // pred_fallthru
          _
        // Predicated region
        $region109: #{bert_for_relations_forward.1} parent=99 // pred_check
          %p2318 = pneg %p525
        $region110: #{bert_for_relations_forward.1} parent=99 // pred_check_branch
          %2320 = sbr.rel (%p2318) target = $region112
        $region111: #{bert_for_relations_forward.1} parent=99 // pred_region
          %2322 = vsyncadd [#allocation5], 0
          %s2324 = sshll.u32 [#allocation4], 4
          %s2325 = int_to_ptr.vmem [resolvable:$true] %s2324
          %s2326 = sshll.u32 %s20, 4
          %s2327 = int_to_ptr.hbm [resolvable:$true] %s2326
          %2329 = dma.vmem_to_hbm [thread:$0]  %s2325, 32, %s2327, [#allocation5]
        $region112: #{bert_for_relations_forward.1} parent=99 // pred_fallthru
          _
        // Predicated region
        $region113: #{bert_for_relations_forward.1} parent=99 // pred_check
          %p2330 = pneg %p525
        $region114: #{bert_for_relations_forward.1} parent=99 // pred_check_branch
          %2332 = sbr.rel (%p2330) target = $region116
        $region115: #{bert_for_relations_forward.1} parent=99 // pred_region
          %2334 = dma.done [#allocation5], 32
        $region116: #{bert_for_relations_forward.1} parent=99 // pred_fallthru
          _
      $region100: #{bert_for_relations_forward.1} parent=5 // pred_fallthru
        _
      %p2335 = scmp.le.s32.totalorder 2, %s27
      // Predicated region
      $region117: #{bert_for_relations_forward.1} parent=5 // pred_check
        %p2336 = pneg %p2335
      $region118: #{bert_for_relations_forward.1} parent=5 // pred_check_branch
        %2338 = sbr.rel (%p2336) target = $region120
      $region119: #{bert_for_relations_forward.1} parent=5 // pred_region
        %s2339 = ssub.s32 %s27, 2
      $region120: #{bert_for_relations_forward.1} parent=5 // pred_fallthru
        _
    $region6: #{bert_for_relations_forward.1} parent=1 // loop_footer
      %s31 = sadd.s32 1, %s27
    $region7: #{bert_for_relations_forward.1} parent=1 // loop_footer_branch
      %26 = sbr.rel target = $region3
    $region8: #{bert_for_relations_forward.1} parent=1 // loop_exit
      _
    %2340 = vsyncpa [#allocation5], 1
    %s2341 = scalar_lea.sflag [#allocation5], 1
    %2342 = vsyncpa %s2341, 1

</llo_original>
